<compile_context>
chip_gen: v7x
topology: tpu7x:2x2x1
jax: 0.10.0
libtpu: 0.0.40
codegen_flags: <defaults>
</compile_context>

<pallas_src>
import functools
import math

import jax
import jax.numpy as jnp
from jax.experimental import pallas as pl
from jax.experimental.pallas import tpu as pltpu


# bf16 MXU operands (f32 accumulation kept). Set to None for pure-f32 (bit-parity) mode.
MXU_COMPUTE_DTYPE = jnp.bfloat16


# ----------------------------------------------------------------------------
# Generation-aware VMEM budgets
# ----------------------------------------------------------------------------

def _tpu_vmem_capacity_bytes():
    try:
        return int(pltpu.get_tpu_info().vmem_capacity_bytes)
    except Exception:
        return 64 * 1024 * 1024        # conservative fallback: v7x per-TC VMEM


_VMEM_CAP = _tpu_vmem_capacity_bytes()
# 32 MiB on v5e/v6e (128 MiB physical) and v7x (64 MiB physical): above the small scoped
# defaults, with headroom for the compiler's internal scratch on v7x.
_VMEM_LIMIT = min(_VMEM_CAP // 2, 32 * 1024 * 1024)
_ATTN_BUDGET = int(_VMEM_LIMIT * 0.75)


# ----------------------------------------------------------------------------
# Tile-size helpers
# ----------------------------------------------------------------------------

def _pick_tile(dim, candidates=(512, 256, 128)):
    """Largest candidate that evenly divides `dim`; else the full dim (block == array dim).
    Candidates are 256-aligned first so v6e/v7x's 2x256^2 MXU is fully used when possible."""
    for c in candidates:
        if c <= dim and dim % c == 0:
            return c
    return dim


def _pick_head_block(n_heads, seq, dk, budget_bytes=_ATTN_BUDGET):
    """Heads per attention grid step.  Valid blocks keep the qkv BlockSpec's second-to-last dim
    (hb) and the output lane width (hb*dk) tiling-legal, bounded by a per-step VMEM estimate."""
    mask_bytes = 2 if MXU_COMPUTE_DTYPE is not None else 4
    valid = [h for h in range(1, n_heads + 1)
             if n_heads % h == 0
             and (h == n_heads or (h % 8 == 0 and (h * dk) % 128 == 0))]
    for h in sorted(valid, reverse=True):
        qkv_blk = 3 * h * seq * dk * 4          # f32 activations
        out_blk = h * seq * dk * 4
        bias_blk = seq * seq * mask_bytes
        transient = 2 * seq * seq * 4           # scores + probs (f32, in-register/VMEM)
        per_step = 2 * (qkv_blk + bias_blk) + 2 * out_blk + transient
        if per_step <= budget_bytes:
            return h
    return min(valid)


# ----------------------------------------------------------------------------
# Pallas kernels
# ----------------------------------------------------------------------------

def _linear_kernel(*refs, activation, has_residual, compute_dtype):
    """Tiled matmul with f32 accumulator and fused bias (+ReLU) (+residual) epilogue."""
    if has_residual:
        x_ref, w_ref, b_ref, res_ref, o_ref, acc_ref = refs
    else:
        x_ref, w_ref, b_ref, o_ref, acc_ref = refs
        res_ref = None

    k = pl.program_id(2)

    @pl.when(k == 0)
    def _init():
        acc_ref[...] = jnp.zeros_like(acc_ref)

    x_blk = x_ref[...]
    w_blk = w_ref[...]
    if compute_dtype is not None:
        x_blk = x_blk.astype(compute_dtype)
        w_blk = w_blk.astype(compute_dtype)
    acc_ref[...] += jnp.dot(x_blk, w_blk, preferred_element_type=jnp.float32)

    @pl.when(k == pl.num_programs(2) - 1)
    def _finalize():
        y = acc_ref[...] + b_ref[...].astype(jnp.float32)        # (tm,tn) + (1,tn)
        if activation == "relu":
            y = jnp.maximum(y, 0.0)
        if res_ref is not None:
            y = y + res_ref[...].astype(jnp.float32)              # fused residual add
        o_ref[...] = y.astype(o_ref.dtype)


def linear(x, w, b, activation=None, residual=None, compute_dtype=MXU_COMPUTE_DTYPE):
    """x: (M, K) @ w: (K, N) + b: (N,), optional fused ReLU / residual add.  Tiled + pipelined."""
    M, K = x.shape
    N = w.shape[1]
    tm = _pick_tile(M)
    tn = _pick_tile(N)
    tk = _pick_tile(K, (2048, 1024, 512, 256, 128))   # fewer K steps with bf16 operands
    grid = (M // tm, N // tn, K // tk)

    in_specs = [
        pl.BlockSpec((tm, tk), lambda i, j, k: (i, k)),
        pl.BlockSpec((tk, tn), lambda i, j, k: (k, j)),
        pl.BlockSpec((1, tn), lambda i, j, k: (0, j)),
    ]
    args = [x, w, b.reshape(1, N)]
    if residual is not None:
        in_specs.append(pl.BlockSpec((tm, tn), lambda i, j, k: (i, j)))
        args.append(residual)

    kernel = functools.partial(
        _linear_kernel,
        activation=activation,
        has_residual=residual is not None,
        compute_dtype=compute_dtype,
    )
    return pl.pallas_call(
        kernel,
        out_shape=jax.ShapeDtypeStruct((M, N), x.dtype),
        grid=grid,
        in_specs=in_specs,
        out_specs=pl.BlockSpec((tm, tn), lambda i, j, k: (i, j)),
        scratch_shapes=[pltpu.VMEM((tm, tn), jnp.float32)],
        compiler_params=pltpu.CompilerParams(
            dimension_semantics=("parallel", "parallel", "arbitrary"),
            vmem_limit_bytes=_VMEM_LIMIT,
        ),
    )(*args)


def _mha_kernel(qkv_ref, bias_ref, o_ref, *, heads_per_block, dk, compute_dtype):
    """Self-attention for a block of heads of one batch element.
    qkv block: (1, S, 3, Hblk, dk); additive-mask bias block: (1, S, S);
    out block: (1, S, Hblk*dk)."""
    bias = bias_ref[0].astype(jnp.float32)                       # (S, S), loaded once per step
    for h in range(heads_per_block):                             # static unroll over the block
        q = qkv_ref[0, :, 0, h, :]                               # (S, dk); scale pre-folded in wq
        k = qkv_ref[0, :, 1, h, :]
        v = qkv_ref[0, :, 2, h, :]
        if compute_dtype is not None:
            q = q.astype(compute_dtype)
            k = k.astype(compute_dtype)
            v = v.astype(compute_dtype)
        # Contract dk dims directly -> no explicit K transpose through the XLU.
        s = jax.lax.dot_general(q, k, (((1,), (1,)), ((), ())),
                                preferred_element_type=jnp.float32)      # (S, S)
        s = s + bias                                                      # additive mask
        s = s - jnp.max(s, axis=-1, keepdims=True)
        p = jnp.exp(s)
        p = p * pl.reciprocal(jnp.sum(p, axis=-1, keepdims=True), approx=True)   # EUP
        out_h = jnp.dot(p.astype(v.dtype), v, preferred_element_type=jnp.float32)
        # Per-head lane-dense store straight into the merged-head (B, S, D) output.
        o_ref[0, :, h * dk:(h + 1) * dk] = out_h.astype(o_ref.dtype)


def multi_head_attention(qkv5d, mask_bias, d_model, compute_dtype=MXU_COMPUTE_DTYPE):
    """qkv5d: (B, S, 3, H, dk) fused-QKV view (no host transpose); mask_bias: (B, S, S) additive.
    Returns merged-head output (B, S, D) in float32."""
    B, S, _, H, dk = qkv5d.shape
    hb = _pick_head_block(H, S, dk)
    kernel = functools.partial(_mha_kernel, heads_per_block=hb, dk=dk,
                               compute_dtype=compute_dtype)
    return pl.pallas_call(
        kernel,
        out_shape=jax.ShapeDtypeStruct((B, S, d_model), jnp.float32),
        grid=(B, H // hb),
        in_specs=[
            pl.BlockSpec((1, S, 3, hb, dk), lambda b, h: (b, 0, 0, h, 0)),
            pl.BlockSpec((1, S, S), lambda b, h: (b, 0, 0)),
        ],
        out_specs=pl.BlockSpec((1, S, hb * dk), lambda b, h: (b, 0, h)),
        compiler_params=pltpu.CompilerParams(
            # Both axes parallel so the head axis can also shard across v7x's two TensorCores.
            dimension_semantics=("parallel", "parallel"),
            vmem_limit_bytes=_VMEM_LIMIT,
        ),
    )(qkv5d, mask_bias)


def _layernorm_kernel(x_ref, a_ref, b_ref, o_ref, *, eps, features):
    # Exact semantics of the reference LayerNorm:
    #   mean over last dim; std = unbiased (Bessel, /(N-1)); a*(x-mean)/(std+eps)+b
    x = x_ref[...]                                               # (tm, D)
    mean = jnp.mean(x, axis=-1, keepdims=True)
    diff = x - mean
    var = jnp.sum(diff * diff, axis=-1, keepdims=True) / jnp.float32(features - 1)
    inv = pl.reciprocal(jnp.sqrt(var) + eps, approx=False)       # one recip per row, then vmul
    o_ref[...] = (a_ref[...] * diff * inv + b_ref[...]).astype(o_ref.dtype)


def layer_norm(x2d, a, b, eps=1e-6):
    """x2d: (M, D), a/b: (D,).  Row-tiled (bytes-bounded) and pipelined."""
    M, D = x2d.shape
    max_rows = max(8, (2 * 1024 * 1024) // (D * 4))              # <= ~2 MiB per block
    tm = None
    for c in (1024, 512, 256, 128, 64, 32, 16, 8):
        if c <= max_rows and c <= M and M % c == 0:
            tm = c
            break
    if tm is None:
        tm = M                                                    # small inputs: one block
    return pl.pallas_call(
        functools.partial(_layernorm_kernel, eps=eps, features=D),
        out_shape=jax.ShapeDtypeStruct((M, D), x2d.dtype),
        grid=(M // tm,),
        in_specs=[
            pl.BlockSpec((tm, D), lambda i: (i, 0)),
            pl.BlockSpec((1, D), lambda i: (0, 0)),
            pl.BlockSpec((1, D), lambda i: (0, 0)),
        ],
        out_specs=pl.BlockSpec((tm, D), lambda i: (i, 0)),
        compiler_params=pltpu.CompilerParams(
            dimension_semantics=("parallel",),
            vmem_limit_bytes=_VMEM_LIMIT,
        ),
    )(x2d, a.reshape(1, D), b.reshape(1, D))


# ----------------------------------------------------------------------------
# Parameter init + forward (glue in plain JAX, hot paths in Pallas kernels)
# ----------------------------------------------------------------------------

def init_params(key, n_blocks, d_model, n_heads, d_ff):
    wdtype = MXU_COMPUTE_DTYPE if MXU_COMPUTE_DTYPE is not None else jnp.float32
    dk = d_model // n_heads
    q_scale = 1.0 / math.sqrt(dk)

    def dense(k, fan_in, fan_out):
        kw, kb = jax.random.split(k)
        w = jax.random.normal(kw, (fan_in, fan_out), jnp.float32) * 0.05
        b = jax.random.normal(kb, (fan_out,), jnp.float32) * 0.01
        return w, b

    blocks = []
    for kb in jax.random.split(key, n_blocks):
        ks = jax.random.split(kb, 4)
        wqkv, bqkv = dense(ks[0], d_model, 3 * d_model)   # fused Q|K|V projection, head-major
        # Fold the 1/sqrt(dk) attention scale into the Q columns (mathematically identical
        # forward; removes a per-element multiply in the attention kernel).
        wqkv = wqkv.at[:, :d_model].multiply(q_scale)
        bqkv = bqkv.at[:d_model].multiply(q_scale)
        wo, bo = dense(ks[1], d_model, d_model)
        w1, b1 = dense(ks[2], d_model, d_ff)
        w2, b2 = dense(ks[3], d_ff, d_model)
        blocks.append(dict(
            ln1_a=jnp.ones((d_model,), jnp.float32), ln1_b=jnp.zeros((d_model,), jnp.float32),
            ln2_a=jnp.ones((d_model,), jnp.float32), ln2_b=jnp.zeros((d_model,), jnp.float32),
            # Weights live in HBM in the MXU compute dtype (bf16); biases stay f32 (epilogue).
            wqkv=wqkv.astype(wdtype), bqkv=bqkv,
            wo=wo.astype(wdtype), bo=bo,
            w1=w1.astype(wdtype), b1=b1,
            w2=w2.astype(wdtype), b2=b2,
        ))
    final = dict(a=jnp.ones((d_model,), jnp.float32), b=jnp.zeros((d_model,), jnp.float32))
    return dict(blocks=blocks, final_norm=final, n_heads=n_heads)


def transformer_stack_forward(params, x, mask):
    """x: (B, S, D); mask: (B, S, S). Returns (B, S, D)."""
    B, S, D = x.shape
    H = params["n_heads"]
    dk = D // H

    # Additive mask bias, computed once for the whole stack (replaces per-head compare+select).
    bias_dtype = MXU_COMPUTE_DTYPE if MXU_COMPUTE_DTYPE is not None else jnp.float32
    mask_bias = jnp.where(mask == 0.0, jnp.float32(-1e9), jnp.float32(0.0)).astype(bias_dtype)

    x2d = x.reshape(B * S, D)
    for blk in params["blocks"]:
        # --- sublayer 0: pre-norm multi-head self-attention + residual ---
        # TODO(synk): fuse this LayerNorm into the QKV matmul prologue (tk == D) to save an HBM pass.
        xn = layer_norm(x2d, blk["ln1_a"], blk["ln1_b"])
        qkv = linear(xn, blk["wqkv"], blk["bqkv"])                 # (B*S, 3D), fused QKV
        qkv5d = qkv.reshape(B, S, 3, H, dk)                        # free view, no HBM transpose
        attn = multi_head_attention(qkv5d, mask_bias, D)           # (B, S, D), merged heads
        x2d = linear(attn.reshape(B * S, D), blk["wo"], blk["bo"], residual=x2d)

        # --- sublayer 1: pre-norm position-wise FFN + residual ---
        # TODO(synk): fuse the FFN pair over d_ff tiles (emit_pipeline) to skip the HBM intermediate.
        xn = layer_norm(x2d, blk["ln2_a"], blk["ln2_b"])
        h = linear(xn, blk["w1"], blk["b1"], activation="relu")
        x2d = linear(h, blk["w2"], blk["b2"], residual=x2d)

    # --- final reference-semantics LayerNorm (self.norm) ---
    out = layer_norm(x2d, params["final_norm"]["a"], params["final_norm"]["b"])
    return out.reshape(B, S, D)


if __name__ == "__main__":
    B, S, D = 2, 8, 32
    n_heads, d_ff, n_blocks = 4, 64, 2

    key = jax.random.PRNGKey(0)
    k_x, k_p = jax.random.split(key)
    x = jax.random.normal(k_x, (B, S, D), jnp.float32)
    # causal mask, broadcast over heads
    mask = jnp.tril(jnp.ones((S, S), jnp.float32))[None, :, :].repeat(B, axis=0)

    params = init_params(k_p, n_blocks, D, n_heads, d_ff)

    fwd = jax.jit(lambda xx, mm: transformer_stack_forward(params, xx, mm))
    out = jax.block_until_ready(fwd(x, mask))
    assert out.shape == (B, S, D) and out.dtype == jnp.float32
    assert bool(jnp.all(jnp.isfinite(out)))
    print("KERNEL_OK")
</pallas_src>

<mosaic_0001>
module attributes {stable_mosaic.version = 11 : i64} {
  func.func @_linear_kernel(%arg0: i32, %arg1: i32, %arg2: i32, %arg3: memref<16x32xf32, #tpu.memory_space<vmem>>, %arg4: memref<32x96xbf16, #tpu.memory_space<vmem>>, %arg5: memref<1x96xf32, #tpu.memory_space<vmem>>, %arg6: memref<16x96xf32, #tpu.memory_space<vmem>>, %arg7: memref<16x96xf32, #tpu.memory_space<vmem>>) attributes {dimension_semantics = [#tpu.dimension_semantics<parallel>, #tpu.dimension_semantics<parallel>, #tpu.dimension_semantics<arbitrary>], iteration_bounds = array<i64: 1, 1, 1>, scalar_prefetch = 0 : i64, scratch_operands = 1 : i64, tpu.core_type = #tpu.core_type<tc>, window_params = [{transform_indices = @transform_0, window_bounds = array<i64: 16, 32>}, {transform_indices = @transform_1, window_bounds = array<i64: 32, 96>}, {transform_indices = @transform_2, window_bounds = array<i64: 1, 96>}, {transform_indices = @transform_3, window_bounds = array<i64: 16, 96>}]} {
    %c0_i32 = arith.constant 0 : i32
    %0 = arith.cmpi eq, %arg2, %c0_i32 : i32
    %1 = arith.extui %0 : i1 to i32
    %c0_i32_0 = arith.constant 0 : i32
    %2 = arith.cmpi ne, %1, %c0_i32_0 : i32
    scf.if %2 {
      %cst_10 = arith.constant 0.000000e+00 : f32
      %13 = vector.broadcast %cst_10 : f32 to vector<16x96xf32>
      %c0_11 = arith.constant 0 : index
      %c0_12 = arith.constant 0 : index
      %14 = vector.load %arg7[%c0_11, %c0_12] : memref<16x96xf32, #tpu.memory_space<vmem>>, vector<16x96xf32>
      tpu.vector_store %arg7[%c0_11, %c0_12], %13 {strides = array<i32>} : memref<16x96xf32, #tpu.memory_space<vmem>>, vector<16x96xf32>,
    } else {
    }
    %c0 = arith.constant 0 : index
    %c0_1 = arith.constant 0 : index
    %3 = vector.load %arg3[%c0, %c0_1] : memref<16x32xf32, #tpu.memory_space<vmem>>, vector<16x32xf32>
    %c0_2 = arith.constant 0 : index
    %c0_3 = arith.constant 0 : index
    %4 = vector.load %arg4[%c0_2, %c0_3] : memref<32x96xbf16, #tpu.memory_space<vmem>>, vector<32x96xbf16>
    %5 = arith.truncf %3 : vector<16x32xf32> to vector<16x32xbf16>
    %c0_4 = arith.constant 0 : index
    %c0_5 = arith.constant 0 : index
    %6 = vector.load %arg7[%c0_4, %c0_5] : memref<16x96xf32, #tpu.memory_space<vmem>>, vector<16x96xf32>
    %cst = arith.constant dense<0.000000e+00> : vector<16x96xf32>
    %7 = tpu.matmul %5, %4, %cst {dimension_numbers = #tpu.dot_dimension_numbers<[1], [0], [0], [1], [0, 0, 1, 1], [], []>} : vector<16x32xbf16>, vector<32x96xbf16>, vector<16x96xf32> -> vector<16x96xf32>
    %8 = arith.addf %6, %7 : vector<16x96xf32>
    %c0_6 = arith.constant 0 : index
    %c0_7 = arith.constant 0 : index
    %9 = vector.load %arg7[%c0_6, %c0_7] : memref<16x96xf32, #tpu.memory_space<vmem>>, vector<16x96xf32>
    tpu.vector_store %arg7[%c0_6, %c0_7], %8 {strides = array<i32>} : memref<16x96xf32, #tpu.memory_space<vmem>>, vector<16x96xf32>,
    %c0_i32_8 = arith.constant 0 : i32
    %10 = arith.cmpi eq, %arg2, %c0_i32_8 : i32
    %11 = arith.extui %10 : i1 to i32
    %c0_i32_9 = arith.constant 0 : i32
    %12 = arith.cmpi ne, %11, %c0_i32_9 : i32
    scf.if %12 {
      %c0_10 = arith.constant 0 : index
      %c0_11 = arith.constant 0 : index
      %13 = vector.load %arg7[%c0_10, %c0_11] : memref<16x96xf32, #tpu.memory_space<vmem>>, vector<16x96xf32>
      %c0_12 = arith.constant 0 : index
      %c0_13 = arith.constant 0 : index
      %14 = vector.load %arg5[%c0_12, %c0_13] : memref<1x96xf32, #tpu.memory_space<vmem>>, vector<1x96xf32>
      %15 = vector.broadcast %14 : vector<1x96xf32> to vector<16x96xf32>
      %16 = arith.addf %13, %15 : vector<16x96xf32>
      %c0_14 = arith.constant 0 : index
      %c0_15 = arith.constant 0 : index
      %17 = vector.load %arg6[%c0_14, %c0_15] : memref<16x96xf32, #tpu.memory_space<vmem>>, vector<16x96xf32>
      tpu.vector_store %arg6[%c0_14, %c0_15], %16 {strides = array<i32>} : memref<16x96xf32, #tpu.memory_space<vmem>>, vector<16x96xf32>,
    } else {
    }
    return
  }
  func.func @transform_0(%arg0: i32, %arg1: i32, %arg2: i32) -> (i32, i32) {
    %c0_i32 = arith.constant 0 : i32
    return %arg0, %arg2 : i32, i32
  }
  func.func @transform_1(%arg0: i32, %arg1: i32, %arg2: i32) -> (i32, i32) {
    %c0_i32 = arith.constant 0 : i32
    return %arg2, %arg1 : i32, i32
  }
  func.func @transform_2(%arg0: i32, %arg1: i32, %arg2: i32) -> (i32, i32) {
    %c0_i32 = arith.constant 0 : i32
    %c0_i32_0 = arith.constant 0 : i32
    return %c0_i32, %arg1 : i32, i32
  }
  func.func @transform_3(%arg0: i32, %arg1: i32, %arg2: i32) -> (i32, i32) {
    %c0_i32 = arith.constant 0 : i32
    return %arg0, %arg1 : i32, i32
  }
}

module attributes {stable_mosaic.version = 11 : i64} {
  func.func @_layernorm_kernel(%arg0: i32, %arg1: memref<16x32xf32, #tpu.memory_space<vmem>>, %arg2: memref<1x32xf32, #tpu.memory_space<vmem>>, %arg3: memref<1x32xf32, #tpu.memory_space<vmem>>, %arg4: memref<16x32xf32, #tpu.memory_space<vmem>>) attributes {dimension_semantics = [#tpu.dimension_semantics<parallel>], iteration_bounds = array<i64: 1>, scalar_prefetch = 0 : i64, scratch_operands = 0 : i64, tpu.core_type = #tpu.core_type<tc>, window_params = [{transform_indices = @transform_0, window_bounds = array<i64: 16, 32>}, {pipeline_mode = #tpu.pipeline_mode<synchronous>, transform_indices = @transform_1, window_bounds = array<i64: 1, 32>}, {pipeline_mode = #tpu.pipeline_mode<synchronous>, transform_indices = @transform_2, window_bounds = array<i64: 1, 32>}, {transform_indices = @transform_3, window_bounds = array<i64: 16, 32>}]} {
    %c0 = arith.constant 0 : index
    %c0_0 = arith.constant 0 : index
    %0 = vector.load %arg1[%c0, %c0_0] : memref<16x32xf32, #tpu.memory_space<vmem>>, vector<16x32xf32>
    %cst = arith.constant dense<0.000000e+00> : vector<16xf32>
    %1 = vector.multi_reduction <add>, %0, %cst [1] : vector<16x32xf32> to vector<16xf32>
    %2 = vector.shape_cast %1 : vector<16xf32> to vector<16x1xf32>
    %cst_1 = arith.constant 3.200000e+01 : f32
    %3 = vector.broadcast %cst_1 : f32 to vector<16x1xf32>
    %4 = arith.divf %2, %3 : vector<16x1xf32>
    %5 = vector.broadcast %4 : vector<16x1xf32> to vector<16x32xf32>
    %6 = arith.subf %0, %5 : vector<16x32xf32>
    %7 = arith.mulf %6, %6 : vector<16x32xf32>
    %cst_2 = arith.constant dense<0.000000e+00> : vector<16xf32>
    %8 = vector.multi_reduction <add>, %7, %cst_2 [1] : vector<16x32xf32> to vector<16xf32>
    %9 = vector.shape_cast %8 : vector<16xf32> to vector<16x1xf32>
    %cst_3 = arith.constant 3.100000e+01 : f32
    %10 = vector.broadcast %cst_3 : f32 to vector<16x1xf32>
    %11 = arith.divf %9, %10 : vector<16x1xf32>
    %12 = math.sqrt %11 : vector<16x1xf32>
    %cst_4 = arith.constant 9.99999997E-7 : f32
    %13 = vector.broadcast %cst_4 : f32 to vector<16x1xf32>
    %14 = arith.addf %12, %13 : vector<16x1xf32>
    %15 = tpu.reciprocal %14 : vector<16x1xf32> -> vector<16x1xf32>
    %c0_5 = arith.constant 0 : index
    %c0_6 = arith.constant 0 : index
    %16 = vector.load %arg2[%c0_5, %c0_6] : memref<1x32xf32, #tpu.memory_space<vmem>>, vector<1x32xf32>
    %17 = vector.broadcast %16 : vector<1x32xf32> to vector<16x32xf32>
    %18 = arith.mulf %17, %6 : vector<16x32xf32>
    %19 = vector.broadcast %15 : vector<16x1xf32> to vector<16x32xf32>
    %20 = arith.mulf %18, %19 : vector<16x32xf32>
    %c0_7 = arith.constant 0 : index
    %c0_8 = arith.constant 0 : index
    %21 = vector.load %arg3[%c0_7, %c0_8] : memref<1x32xf32, #tpu.memory_space<vmem>>, vector<1x32xf32>
    %22 = vector.broadcast %21 : vector<1x32xf32> to vector<16x32xf32>
    %23 = arith.addf %20, %22 : vector<16x32xf32>
    %c0_9 = arith.constant 0 : index
    %c0_10 = arith.constant 0 : index
    %24 = vector.load %arg4[%c0_9, %c0_10] : memref<16x32xf32, #tpu.memory_space<vmem>>, vector<16x32xf32>
    tpu.vector_store %arg4[%c0_9, %c0_10], %23 {strides = array<i32>} : memref<16x32xf32, #tpu.memory_space<vmem>>, vector<16x32xf32>,
    return
  }
  func.func @transform_0(%arg0: i32) -> (i32, i32) {
    %c0_i32 = arith.constant 0 : i32
    %c0_i32_0 = arith.constant 0 : i32
    return %arg0, %c0_i32 : i32, i32
  }
  func.func @transform_1(%arg0: i32) -> (i32, i32) {
    %c0_i32 = arith.constant 0 : i32
    %c0_i32_0 = arith.constant 0 : i32
    %c0_i32_1 = arith.constant 0 : i32
    return %c0_i32, %c0_i32_0 : i32, i32
  }
  func.func @transform_2(%arg0: i32) -> (i32, i32) {
    %c0_i32 = arith.constant 0 : i32
    %c0_i32_0 = arith.constant 0 : i32
    %c0_i32_1 = arith.constant 0 : i32
    return %c0_i32, %c0_i32_0 : i32, i32
  }
  func.func @transform_3(%arg0: i32) -> (i32, i32) {
    %c0_i32 = arith.constant 0 : i32
    %c0_i32_0 = arith.constant 0 : i32
    return %arg0, %c0_i32 : i32, i32
  }
}

module attributes {stable_mosaic.version = 11 : i64} {
  func.func @_mha_kernel(%arg0: i32, %arg1: i32, %arg2: memref<1x8x3x4x8xf32, #tpu.memory_space<vmem>>, %arg3: memref<1x8x8xbf16, #tpu.memory_space<vmem>>, %arg4: memref<1x8x32xf32, #tpu.memory_space<vmem>>) attributes {dimension_semantics = [#tpu.dimension_semantics<parallel>, #tpu.dimension_semantics<parallel>], iteration_bounds = array<i64: 2, 1>, scalar_prefetch = 0 : i64, scratch_operands = 0 : i64, tpu.core_type = #tpu.core_type<tc>, window_params = [{transform_indices = @transform_0, window_bounds = array<i64: 1, 8, 3, 4, 8>}, {transform_indices = @transform_1, window_bounds = array<i64: 1, 8, 8>}, {transform_indices = @transform_2, window_bounds = array<i64: 1, 8, 32>}]} {
    %c0 = arith.constant 0 : index
    %c0_0 = arith.constant 0 : index
    %c0_1 = arith.constant 0 : index
    %0 = vector.load %arg3[%c0, %c0_0, %c0_1] : memref<1x8x8xbf16, #tpu.memory_space<vmem>>, vector<1x8x8xbf16>
    %1 = vector.shape_cast %0 : vector<1x8x8xbf16> to vector<8x8xbf16>
    %2 = arith.extf %1 : vector<8x8xbf16> to vector<8x8xf32>
    %c0_2 = arith.constant 0 : index
    %c0_3 = arith.constant 0 : index
    %c0_4 = arith.constant 0 : index
    %c0_5 = arith.constant 0 : index
    %c0_6 = arith.constant 0 : index
    %3 = vector.load %arg2[%c0_2, %c0_3, %c0_4, %c0_5, %c0_6] : memref<1x8x3x4x8xf32, #tpu.memory_space<vmem>>, vector<1x8x1x1x8xf32>
    %4 = vector.shape_cast %3 : vector<1x8x1x1x8xf32> to vector<8x8xf32>
    %c0_7 = arith.constant 0 : index
    %c0_8 = arith.constant 0 : index
    %c1 = arith.constant 1 : index
    %c0_9 = arith.constant 0 : index
    %c0_10 = arith.constant 0 : index
    %5 = vector.load %arg2[%c0_7, %c0_8, %c1, %c0_9, %c0_10] : memref<1x8x3x4x8xf32, #tpu.memory_space<vmem>>, vector<1x8x1x1x8xf32>
    %6 = vector.shape_cast %5 : vector<1x8x1x1x8xf32> to vector<8x8xf32>
    %c0_11 = arith.constant 0 : index
    %c0_12 = arith.constant 0 : index
    %c2 = arith.constant 2 : index
    %c0_13 = arith.constant 0 : index
    %c0_14 = arith.constant 0 : index
    %7 = vector.load %arg2[%c0_11, %c0_12, %c2, %c0_13, %c0_14] : memref<1x8x3x4x8xf32, #tpu.memory_space<vmem>>, vector<1x8x1x1x8xf32>
    %8 = vector.shape_cast %7 : vector<1x8x1x1x8xf32> to vector<8x8xf32>
    %9 = arith.truncf %4 : vector<8x8xf32> to vector<8x8xbf16>
    %10 = arith.truncf %6 : vector<8x8xf32> to vector<8x8xbf16>
    %11 = arith.truncf %8 : vector<8x8xf32> to vector<8x8xbf16>
    %cst = arith.constant dense<0.000000e+00> : vector<8x8xf32>
    %12 = tpu.matmul %9, %10, %cst {dimension_numbers = #tpu.dot_dimension_numbers<[1], [1], [0], [0], [0, 0, 1, 0], [], []>} : vector<8x8xbf16>, vector<8x8xbf16>, vector<8x8xf32> -> vector<8x8xf32>
    %13 = arith.addf %12, %2 : vector<8x8xf32>
    %cst_15 = arith.constant dense<0xFF800000> : vector<8xf32>
    %14 = vector.multi_reduction <maximumf>, %13, %cst_15 [1] : vector<8x8xf32> to vector<8xf32>
    %15 = vector.shape_cast %14 : vector<8xf32> to vector<8x1xf32>
    %16 = vector.broadcast %15 : vector<8x1xf32> to vector<8x8xf32>
    %17 = arith.subf %13, %16 : vector<8x8xf32>
    %18 = math.exp %17 : vector<8x8xf32>
    %cst_16 = arith.constant dense<0.000000e+00> : vector<8xf32>
    %19 = vector.multi_reduction <add>, %18, %cst_16 [1] : vector<8x8xf32> to vector<8xf32>
    %20 = vector.shape_cast %19 : vector<8xf32> to vector<8x1xf32>
    %21 = tpu.reciprocal %20 {approx = true} : vector<8x1xf32> -> vector<8x1xf32>
    %22 = vector.broadcast %21 : vector<8x1xf32> to vector<8x8xf32>
    %23 = arith.mulf %18, %22 : vector<8x8xf32>
    %24 = arith.truncf %23 : vector<8x8xf32> to vector<8x8xbf16>
    %cst_17 = arith.constant dense<0.000000e+00> : vector<8x8xf32>
    %25 = tpu.matmul %24, %11, %cst_17 {dimension_numbers = #tpu.dot_dimension_numbers<[1], [0], [0], [1], [0, 0, 1, 1], [], []>} : vector<8x8xbf16>, vector<8x8xbf16>, vector<8x8xf32> -> vector<8x8xf32>
    %c0_18 = arith.constant 0 : index
    %c0_19 = arith.constant 0 : index
    %c0_20 = arith.constant 0 : index
    %26 = vector.load %arg4[%c0_18, %c0_19, %c0_20] : memref<1x8x32xf32, #tpu.memory_space<vmem>>, vector<1x8x8xf32>
    %27 = vector.shape_cast %26 : vector<1x8x8xf32> to vector<8x8xf32>
    %28 = vector.shape_cast %25 : vector<8x8xf32> to vector<1x8x8xf32>
    tpu.vector_store %arg4[%c0_18, %c0_19, %c0_20], %28 {strides = array<i32>} : memref<1x8x32xf32, #tpu.memory_space<vmem>>, vector<1x8x8xf32>,
    %c0_21 = arith.constant 0 : index
    %c0_22 = arith.constant 0 : index
    %c0_23 = arith.constant 0 : index
    %c1_24 = arith.constant 1 : index
    %c0_25 = arith.constant 0 : index
    %29 = vector.load %arg2[%c0_21, %c0_22, %c0_23, %c1_24, %c0_25] : memref<1x8x3x4x8xf32, #tpu.memory_space<vmem>>, vector<1x8x1x1x8xf32>
    %30 = vector.shape_cast %29 : vector<1x8x1x1x8xf32> to vector<8x8xf32>
    %c0_26 = arith.constant 0 : index
    %c0_27 = arith.constant 0 : index
    %c1_28 = arith.constant 1 : index
    %c1_29 = arith.constant 1 : index
    %c0_30 = arith.constant 0 : index
    %31 = vector.load %arg2[%c0_26, %c0_27, %c1_28, %c1_29, %c0_30] : memref<1x8x3x4x8xf32, #tpu.memory_space<vmem>>, vector<1x8x1x1x8xf32>
    %32 = vector.shape_cast %31 : vector<1x8x1x1x8xf32> to vector<8x8xf32>
    %c0_31 = arith.constant 0 : index
    %c0_32 = arith.constant 0 : index
    %c2_33 = arith.constant 2 : index
    %c1_34 = arith.constant 1 : index
    %c0_35 = arith.constant 0 : index
    %33 = vector.load %arg2[%c0_31, %c0_32, %c2_33, %c1_34, %c0_35] : memref<1x8x3x4x8xf32, #tpu.memory_space<vmem>>, vector<1x8x1x1x8xf32>
    %34 = vector.shape_cast %33 : vector<1x8x1x1x8xf32> to vector<8x8xf32>
    %35 = arith.truncf %30 : vector<8x8xf32> to vector<8x8xbf16>
    %36 = arith.truncf %32 : vector<8x8xf32> to vector<8x8xbf16>
    %37 = arith.truncf %34 : vector<8x8xf32> to vector<8x8xbf16>
    %cst_36 = arith.constant dense<0.000000e+00> : vector<8x8xf32>
    %38 = tpu.matmul %35, %36, %cst_36 {dimension_numbers = #tpu.dot_dimension_numbers<[1], [1], [0], [0], [0, 0, 1, 0], [], []>} : vector<8x8xbf16>, vector<8x8xbf16>, vector<8x8xf32> -> vector<8x8xf32>
    %39 = arith.addf %38, %2 : vector<8x8xf32>
    %cst_37 = arith.constant dense<0xFF800000> : vector<8xf32>
    %40 = vector.multi_reduction <maximumf>, %39, %cst_37 [1] : vector<8x8xf32> to vector<8xf32>
    %41 = vector.shape_cast %40 : vector<8xf32> to vector<8x1xf32>
    %42 = vector.broadcast %41 : vector<8x1xf32> to vector<8x8xf32>
    %43 = arith.subf %39, %42 : vector<8x8xf32>
    %44 = math.exp %43 : vector<8x8xf32>
    %cst_38 = arith.constant dense<0.000000e+00> : vector<8xf32>
    %45 = vector.multi_reduction <add>, %44, %cst_38 [1] : vector<8x8xf32> to vector<8xf32>
    %46 = vector.shape_cast %45 : vector<8xf32> to vector<8x1xf32>
    %47 = tpu.reciprocal %46 {approx = true} : vector<8x1xf32> -> vector<8x1xf32>
    %48 = vector.broadcast %47 : vector<8x1xf32> to vector<8x8xf32>
    %49 = arith.mulf %44, %48 : vector<8x8xf32>
    %50 = arith.truncf %49 : vector<8x8xf32> to vector<8x8xbf16>
    %cst_39 = arith.constant dense<0.000000e+00> : vector<8x8xf32>
    %51 = tpu.matmul %50, %37, %cst_39 {dimension_numbers = #tpu.dot_dimension_numbers<[1], [0], [0], [1], [0, 0, 1, 1], [], []>} : vector<8x8xbf16>, vector<8x8xbf16>, vector<8x8xf32> -> vector<8x8xf32>
    %c0_40 = arith.constant 0 : index
    %c0_41 = arith.constant 0 : index
    %c8 = arith.constant 8 : index
    %52 = vector.load %arg4[%c0_40, %c0_41, %c8] : memref<1x8x32xf32, #tpu.memory_space<vmem>>, vector<1x8x8xf32>
    %53 = vector.shape_cast %52 : vector<1x8x8xf32> to vector<8x8xf32>
    %54 = vector.shape_cast %51 : vector<8x8xf32> to vector<1x8x8xf32>
    tpu.vector_store %arg4[%c0_40, %c0_41, %c8], %54 {strides = array<i32>} : memref<1x8x32xf32, #tpu.memory_space<vmem>>, vector<1x8x8xf32>,
    %c0_42 = arith.constant 0 : index
    %c0_43 = arith.constant 0 : index
    %c0_44 = arith.constant 0 : index
    %c2_45 = arith.constant 2 : index
    %c0_46 = arith.constant 0 : index
    %55 = vector.load %arg2[%c0_42, %c0_43, %c0_44, %c2_45, %c0_46] : memref<1x8x3x4x8xf32, #tpu.memory_space<vmem>>, vector<1x8x1x1x8xf32>
    %56 = vector.shape_cast %55 : vector<1x8x1x1x8xf32> to vector<8x8xf32>
    %c0_47 = arith.constant 0 : index
    %c0_48 = arith.constant 0 : index
    %c1_49 = arith.constant 1 : index
    %c2_50 = arith.constant 2 : index
    %c0_51 = arith.constant 0 : index
    %57 = vector.load %arg2[%c0_47, %c0_48, %c1_49, %c2_50, %c0_51] : memref<1x8x3x4x8xf32, #tpu.memory_space<vmem>>, vector<1x8x1x1x8xf32>
    %58 = vector.shape_cast %57 : vector<1x8x1x1x8xf32> to vector<8x8xf32>
    %c0_52 = arith.constant 0 : index
    %c0_53 = arith.constant 0 : index
    %c2_54 = arith.constant 2 : index
    %c2_55 = arith.constant 2 : index
    %c0_56 = arith.constant 0 : index
    %59 = vector.load %arg2[%c0_52, %c0_53, %c2_54, %c2_55, %c0_56] : memref<1x8x3x4x8xf32, #tpu.memory_space<vmem>>, vector<1x8x1x1x8xf32>
    %60 = vector.shape_cast %59 : vector<1x8x1x1x8xf32> to vector<8x8xf32>
    %61 = arith.truncf %56 : vector<8x8xf32> to vector<8x8xbf16>
    %62 = arith.truncf %58 : vector<8x8xf32> to vector<8x8xbf16>
    %63 = arith.truncf %60 : vector<8x8xf32> to vector<8x8xbf16>
    %cst_57 = arith.constant dense<0.000000e+00> : vector<8x8xf32>
    %64 = tpu.matmul %61, %62, %cst_57 {dimension_numbers = #tpu.dot_dimension_numbers<[1], [1], [0], [0], [0, 0, 1, 0], [], []>} : vector<8x8xbf16>, vector<8x8xbf16>, vector<8x8xf32> -> vector<8x8xf32>
    %65 = arith.addf %64, %2 : vector<8x8xf32>
    %cst_58 = arith.constant dense<0xFF800000> : vector<8xf32>
    %66 = vector.multi_reduction <maximumf>, %65, %cst_58 [1] : vector<8x8xf32> to vector<8xf32>
    %67 = vector.shape_cast %66 : vector<8xf32> to vector<8x1xf32>
    %68 = vector.broadcast %67 : vector<8x1xf32> to vector<8x8xf32>
    %69 = arith.subf %65, %68 : vector<8x8xf32>
    %70 = math.exp %69 : vector<8x8xf32>
    %cst_59 = arith.constant dense<0.000000e+00> : vector<8xf32>
    %71 = vector.multi_reduction <add>, %70, %cst_59 [1] : vector<8x8xf32> to vector<8xf32>
    %72 = vector.shape_cast %71 : vector<8xf32> to vector<8x1xf32>
    %73 = tpu.reciprocal %72 {approx = true} : vector<8x1xf32> -> vector<8x1xf32>
    %74 = vector.broadcast %73 : vector<8x1xf32> to vector<8x8xf32>
    %75 = arith.mulf %70, %74 : vector<8x8xf32>
    %76 = arith.truncf %75 : vector<8x8xf32> to vector<8x8xbf16>
    %cst_60 = arith.constant dense<0.000000e+00> : vector<8x8xf32>
    %77 = tpu.matmul %76, %63, %cst_60 {dimension_numbers = #tpu.dot_dimension_numbers<[1], [0], [0], [1], [0, 0, 1, 1], [], []>} : vector<8x8xbf16>, vector<8x8xbf16>, vector<8x8xf32> -> vector<8x8xf32>
    %c0_61 = arith.constant 0 : index
    %c0_62 = arith.constant 0 : index
    %c16 = arith.constant 16 : index
    %78 = vector.load %arg4[%c0_61, %c0_62, %c16] : memref<1x8x32xf32, #tpu.memory_space<vmem>>, vector<1x8x8xf32>
    %79 = vector.shape_cast %78 : vector<1x8x8xf32> to vector<8x8xf32>
    %80 = vector.shape_cast %77 : vector<8x8xf32> to vector<1x8x8xf32>
    tpu.vector_store %arg4[%c0_61, %c0_62, %c16], %80 {strides = array<i32>} : memref<1x8x32xf32, #tpu.memory_space<vmem>>, vector<1x8x8xf32>,
    %c0_63 = arith.constant 0 : index
    %c0_64 = arith.constant 0 : index
    %c0_65 = arith.constant 0 : index
    %c3 = arith.constant 3 : index
    %c0_66 = arith.constant 0 : index
    %81 = vector.load %arg2[%c0_63, %c0_64, %c0_65, %c3, %c0_66] : memref<1x8x3x4x8xf32, #tpu.memory_space<vmem>>, vector<1x8x1x1x8xf32>
    %82 = vector.shape_cast %81 : vector<1x8x1x1x8xf32> to vector<8x8xf32>
    %c0_67 = arith.constant 0 : index
    %c0_68 = arith.constant 0 : index
    %c1_69 = arith.constant 1 : index
    %c3_70 = arith.constant 3 : index
    %c0_71 = arith.constant 0 : index
    %83 = vector.load %arg2[%c0_67, %c0_68, %c1_69, %c3_70, %c0_71] : memref<1x8x3x4x8xf32, #tpu.memory_space<vmem>>, vector<1x8x1x1x8xf32>
    %84 = vector.shape_cast %83 : vector<1x8x1x1x8xf32> to vector<8x8xf32>
    %c0_72 = arith.constant 0 : index
    %c0_73 = arith.constant 0 : index
    %c2_74 = arith.constant 2 : index
    %c3_75 = arith.constant 3 : index
    %c0_76 = arith.constant 0 : index
    %85 = vector.load %arg2[%c0_72, %c0_73, %c2_74, %c3_75, %c0_76] : memref<1x8x3x4x8xf32, #tpu.memory_space<vmem>>, vector<1x8x1x1x8xf32>
    %86 = vector.shape_cast %85 : vector<1x8x1x1x8xf32> to vector<8x8xf32>
    %87 = arith.truncf %82 : vector<8x8xf32> to vector<8x8xbf16>
    %88 = arith.truncf %84 : vector<8x8xf32> to vector<8x8xbf16>
    %89 = arith.truncf %86 : vector<8x8xf32> to vector<8x8xbf16>
    %cst_77 = arith.constant dense<0.000000e+00> : vector<8x8xf32>
    %90 = tpu.matmul %87, %88, %cst_77 {dimension_numbers = #tpu.dot_dimension_numbers<[1], [1], [0], [0], [0, 0, 1, 0], [], []>} : vector<8x8xbf16>, vector<8x8xbf16>, vector<8x8xf32> -> vector<8x8xf32>
    %91 = arith.addf %90, %2 : vector<8x8xf32>
    %cst_78 = arith.constant dense<0xFF800000> : vector<8xf32>
    %92 = vector.multi_reduction <maximumf>, %91, %cst_78 [1] : vector<8x8xf32> to vector<8xf32>
    %93 = vector.shape_cast %92 : vector<8xf32> to vector<8x1xf32>
    %94 = vector.broadcast %93 : vector<8x1xf32> to vector<8x8xf32>
    %95 = arith.subf %91, %94 : vector<8x8xf32>
    %96 = math.exp %95 : vector<8x8xf32>
    %cst_79 = arith.constant dense<0.000000e+00> : vector<8xf32>
    %97 = vector.multi_reduction <add>, %96, %cst_79 [1] : vector<8x8xf32> to vector<8xf32>
    %98 = vector.shape_cast %97 : vector<8xf32> to vector<8x1xf32>
    %99 = tpu.reciprocal %98 {approx = true} : vector<8x1xf32> -> vector<8x1xf32>
    %100 = vector.broadcast %99 : vector<8x1xf32> to vector<8x8xf32>
    %101 = arith.mulf %96, %100 : vector<8x8xf32>
    %102 = arith.truncf %101 : vector<8x8xf32> to vector<8x8xbf16>
    %cst_80 = arith.constant dense<0.000000e+00> : vector<8x8xf32>
    %103 = tpu.matmul %102, %89, %cst_80 {dimension_numbers = #tpu.dot_dimension_numbers<[1], [0], [0], [1], [0, 0, 1, 1], [], []>} : vector<8x8xbf16>, vector<8x8xbf16>, vector<8x8xf32> -> vector<8x8xf32>
    %c0_81 = arith.constant 0 : index
    %c0_82 = arith.constant 0 : index
    %c24 = arith.constant 24 : index
    %104 = vector.load %arg4[%c0_81, %c0_82, %c24] : memref<1x8x32xf32, #tpu.memory_space<vmem>>, vector<1x8x8xf32>
    %105 = vector.shape_cast %104 : vector<1x8x8xf32> to vector<8x8xf32>
    %106 = vector.shape_cast %103 : vector<8x8xf32> to vector<1x8x8xf32>
    tpu.vector_store %arg4[%c0_81, %c0_82, %c24], %106 {strides = array<i32>} : memref<1x8x32xf32, #tpu.memory_space<vmem>>, vector<1x8x8xf32>,
    return
  }
  func.func @transform_0(%arg0: i32, %arg1: i32) -> (i32, i32, i32, i32, i32) {
    %c0_i32 = arith.constant 0 : i32
    %c0_i32_0 = arith.constant 0 : i32
    %c0_i32_1 = arith.constant 0 : i32
    %c0_i32_2 = arith.constant 0 : i32
    return %arg0, %c0_i32, %c0_i32_0, %arg1, %c0_i32_1 : i32, i32, i32, i32, i32
  }
  func.func @transform_1(%arg0: i32, %arg1: i32) -> (i32, i32, i32) {
    %c0_i32 = arith.constant 0 : i32
    %c0_i32_0 = arith.constant 0 : i32
    %c0_i32_1 = arith.constant 0 : i32
    return %arg0, %c0_i32, %c0_i32_0 : i32, i32, i32
  }
  func.func @transform_2(%arg0: i32, %arg1: i32) -> (i32, i32, i32) {
    %c0_i32 = arith.constant 0 : i32
    %c0_i32_0 = arith.constant 0 : i32
    return %arg0, %c0_i32, %arg1 : i32, i32, i32
  }
}

module attributes {stable_mosaic.version = 11 : i64} {
  func.func @_linear_kernel(%arg0: i32, %arg1: i32, %arg2: i32, %arg3: memref<16x64xf32, #tpu.memory_space<vmem>>, %arg4: memref<64x32xbf16, #tpu.memory_space<vmem>>, %arg5: memref<1x32xf32, #tpu.memory_space<vmem>>, %arg6: memref<16x32xf32, #tpu.memory_space<vmem>>, %arg7: memref<16x32xf32, #tpu.memory_space<vmem>>, %arg8: memref<16x32xf32, #tpu.memory_space<vmem>>) attributes {dimension_semantics = [#tpu.dimension_semantics<parallel>, #tpu.dimension_semantics<parallel>, #tpu.dimension_semantics<arbitrary>], iteration_bounds = array<i64: 1, 1, 1>, scalar_prefetch = 0 : i64, scratch_operands = 1 : i64, tpu.core_type = #tpu.core_type<tc>, window_params = [{transform_indices = @transform_0, window_bounds = array<i64: 16, 64>}, {transform_indices = @transform_1, window_bounds = array<i64: 64, 32>}, {transform_indices = @transform_2, window_bounds = array<i64: 1, 32>}, {transform_indices = @transform_3, window_bounds = array<i64: 16, 32>}, {transform_indices = @transform_4, window_bounds = array<i64: 16, 32>}]} {
    %c0_i32 = arith.constant 0 : i32
    %0 = arith.cmpi eq, %arg2, %c0_i32 : i32
    %1 = arith.extui %0 : i1 to i32
    %c0_i32_0 = arith.constant 0 : i32
    %2 = arith.cmpi ne, %1, %c0_i32_0 : i32
    scf.if %2 {
      %cst_10 = arith.constant 0.000000e+00 : f32
      %13 = vector.broadcast %cst_10 : f32 to vector<16x32xf32>
      %c0_11 = arith.constant 0 : index
      %c0_12 = arith.constant 0 : index
      %14 = vector.load %arg8[%c0_11, %c0_12] : memref<16x32xf32, #tpu.memory_space<vmem>>, vector<16x32xf32>
      tpu.vector_store %arg8[%c0_11, %c0_12], %13 {strides = array<i32>} : memref<16x32xf32, #tpu.memory_space<vmem>>, vector<16x32xf32>,
    } else {
    }
    %c0 = arith.constant 0 : index
    %c0_1 = arith.constant 0 : index
    %3 = vector.load %arg3[%c0, %c0_1] : memref<16x64xf32, #tpu.memory_space<vmem>>, vector<16x64xf32>
    %c0_2 = arith.constant 0 : index
    %c0_3 = arith.constant 0 : index
    %4 = vector.load %arg4[%c0_2, %c0_3] : memref<64x32xbf16, #tpu.memory_space<vmem>>, vector<64x32xbf16>
    %5 = arith.truncf %3 : vector<16x64xf32> to vector<16x64xbf16>
    %c0_4 = arith.constant 0 : index
    %c0_5 = arith.constant 0 : index
    %6 = vector.load %arg8[%c0_4, %c0_5] : memref<16x32xf32, #tpu.memory_space<vmem>>, vector<16x32xf32>
    %cst = arith.constant dense<0.000000e+00> : vector<16x32xf32>
    %7 = tpu.matmul %5, %4, %cst {dimension_numbers = #tpu.dot_dimension_numbers<[1], [0], [0], [1], [0, 0, 1, 1], [], []>} : vector<16x64xbf16>, vector<64x32xbf16>, vector<16x32xf32> -> vector<16x32xf32>
    %8 = arith.addf %6, %7 : vector<16x32xf32>
    %c0_6 = arith.constant 0 : index
    %c0_7 = arith.constant 0 : index
    %9 = vector.load %arg8[%c0_6, %c0_7] : memref<16x32xf32, #tpu.memory_space<vmem>>, vector<16x32xf32>
    tpu.vector_store %arg8[%c0_6, %c0_7], %8 {strides = array<i32>} : memref<16x32xf32, #tpu.memory_space<vmem>>, vector<16x32xf32>,
    %c0_i32_8 = arith.constant 0 : i32
    %10 = arith.cmpi eq, %arg2, %c0_i32_8 : i32
    %11 = arith.extui %10 : i1 to i32
    %c0_i32_9 = arith.constant 0 : i32
    %12 = arith.cmpi ne, %11, %c0_i32_9 : i32
    scf.if %12 {
      %c0_10 = arith.constant 0 : index
      %c0_11 = arith.constant 0 : index
      %13 = vector.load %arg8[%c0_10, %c0_11] : memref<16x32xf32, #tpu.memory_space<vmem>>, vector<16x32xf32>
      %c0_12 = arith.constant 0 : index
      %c0_13 = arith.constant 0 : index
      %14 = vector.load %arg5[%c0_12, %c0_13] : memref<1x32xf32, #tpu.memory_space<vmem>>, vector<1x32xf32>
      %15 = vector.broadcast %14 : vector<1x32xf32> to vector<16x32xf32>
      %16 = arith.addf %13, %15 : vector<16x32xf32>
      %c0_14 = arith.constant 0 : index
      %c0_15 = arith.constant 0 : index
      %17 = vector.load %arg6[%c0_14, %c0_15] : memref<16x32xf32, #tpu.memory_space<vmem>>, vector<16x32xf32>
      %18 = arith.addf %16, %17 : vector<16x32xf32>
      %c0_16 = arith.constant 0 : index
      %c0_17 = arith.constant 0 : index
      %19 = vector.load %arg7[%c0_16, %c0_17] : memref<16x32xf32, #tpu.memory_space<vmem>>, vector<16x32xf32>
      tpu.vector_store %arg7[%c0_16, %c0_17], %18 {strides = array<i32>} : memref<16x32xf32, #tpu.memory_space<vmem>>, vector<16x32xf32>,
    } else {
    }
    return
  }
  func.func @transform_0(%arg0: i32, %arg1: i32, %arg2: i32) -> (i32, i32) {
    %c0_i32 = arith.constant 0 : i32
    return %arg0, %arg2 : i32, i32
  }
  func.func @transform_1(%arg0: i32, %arg1: i32, %arg2: i32) -> (i32, i32) {
    %c0_i32 = arith.constant 0 : i32
    return %arg2, %arg1 : i32, i32
  }
  func.func @transform_2(%arg0: i32, %arg1: i32, %arg2: i32) -> (i32, i32) {
    %c0_i32 = arith.constant 0 : i32
    %c0_i32_0 = arith.constant 0 : i32
    return %c0_i32, %arg1 : i32, i32
  }
  func.func @transform_3(%arg0: i32, %arg1: i32, %arg2: i32) -> (i32, i32) {
    %c0_i32 = arith.constant 0 : i32
    return %arg0, %arg1 : i32, i32
  }
  func.func @transform_4(%arg0: i32, %arg1: i32, %arg2: i32) -> (i32, i32) {
    %c0_i32 = arith.constant 0 : i32
    return %arg0, %arg1 : i32, i32
  }
}

module attributes {stable_mosaic.version = 11 : i64} {
  func.func @_linear_kernel(%arg0: i32, %arg1: i32, %arg2: i32, %arg3: memref<16x32xf32, #tpu.memory_space<vmem>>, %arg4: memref<32x64xbf16, #tpu.memory_space<vmem>>, %arg5: memref<1x64xf32, #tpu.memory_space<vmem>>, %arg6: memref<16x64xf32, #tpu.memory_space<vmem>>, %arg7: memref<16x64xf32, #tpu.memory_space<vmem>>) attributes {dimension_semantics = [#tpu.dimension_semantics<parallel>, #tpu.dimension_semantics<parallel>, #tpu.dimension_semantics<arbitrary>], iteration_bounds = array<i64: 1, 1, 1>, scalar_prefetch = 0 : i64, scratch_operands = 1 : i64, tpu.core_type = #tpu.core_type<tc>, window_params = [{transform_indices = @transform_0, window_bounds = array<i64: 16, 32>}, {transform_indices = @transform_1, window_bounds = array<i64: 32, 64>}, {transform_indices = @transform_2, window_bounds = array<i64: 1, 64>}, {transform_indices = @transform_3, window_bounds = array<i64: 16, 64>}]} {
    %c0_i32 = arith.constant 0 : i32
    %0 = arith.cmpi eq, %arg2, %c0_i32 : i32
    %1 = arith.extui %0 : i1 to i32
    %c0_i32_0 = arith.constant 0 : i32
    %2 = arith.cmpi ne, %1, %c0_i32_0 : i32
    scf.if %2 {
      %cst_10 = arith.constant 0.000000e+00 : f32
      %13 = vector.broadcast %cst_10 : f32 to vector<16x64xf32>
      %c0_11 = arith.constant 0 : index
      %c0_12 = arith.constant 0 : index
      %14 = vector.load %arg7[%c0_11, %c0_12] : memref<16x64xf32, #tpu.memory_space<vmem>>, vector<16x64xf32>
      tpu.vector_store %arg7[%c0_11, %c0_12], %13 {strides = array<i32>} : memref<16x64xf32, #tpu.memory_space<vmem>>, vector<16x64xf32>,
    } else {
    }
    %c0 = arith.constant 0 : index
    %c0_1 = arith.constant 0 : index
    %3 = vector.load %arg3[%c0, %c0_1] : memref<16x32xf32, #tpu.memory_space<vmem>>, vector<16x32xf32>
    %c0_2 = arith.constant 0 : index
    %c0_3 = arith.constant 0 : index
    %4 = vector.load %arg4[%c0_2, %c0_3] : memref<32x64xbf16, #tpu.memory_space<vmem>>, vector<32x64xbf16>
    %5 = arith.truncf %3 : vector<16x32xf32> to vector<16x32xbf16>
    %c0_4 = arith.constant 0 : index
    %c0_5 = arith.constant 0 : index
    %6 = vector.load %arg7[%c0_4, %c0_5] : memref<16x64xf32, #tpu.memory_space<vmem>>, vector<16x64xf32>
    %cst = arith.constant dense<0.000000e+00> : vector<16x64xf32>
    %7 = tpu.matmul %5, %4, %cst {dimension_numbers = #tpu.dot_dimension_numbers<[1], [0], [0], [1], [0, 0, 1, 1], [], []>} : vector<16x32xbf16>, vector<32x64xbf16>, vector<16x64xf32> -> vector<16x64xf32>
    %8 = arith.addf %6, %7 : vector<16x64xf32>
    %c0_6 = arith.constant 0 : index
    %c0_7 = arith.constant 0 : index
    %9 = vector.load %arg7[%c0_6, %c0_7] : memref<16x64xf32, #tpu.memory_space<vmem>>, vector<16x64xf32>
    tpu.vector_store %arg7[%c0_6, %c0_7], %8 {strides = array<i32>} : memref<16x64xf32, #tpu.memory_space<vmem>>, vector<16x64xf32>,
    %c0_i32_8 = arith.constant 0 : i32
    %10 = arith.cmpi eq, %arg2, %c0_i32_8 : i32
    %11 = arith.extui %10 : i1 to i32
    %c0_i32_9 = arith.constant 0 : i32
    %12 = arith.cmpi ne, %11, %c0_i32_9 : i32
    scf.if %12 {
      %c0_10 = arith.constant 0 : index
      %c0_11 = arith.constant 0 : index
      %13 = vector.load %arg7[%c0_10, %c0_11] : memref<16x64xf32, #tpu.memory_space<vmem>>, vector<16x64xf32>
      %c0_12 = arith.constant 0 : index
      %c0_13 = arith.constant 0 : index
      %14 = vector.load %arg5[%c0_12, %c0_13] : memref<1x64xf32, #tpu.memory_space<vmem>>, vector<1x64xf32>
      %15 = vector.broadcast %14 : vector<1x64xf32> to vector<16x64xf32>
      %16 = arith.addf %13, %15 : vector<16x64xf32>
      %cst_14 = arith.constant 0.000000e+00 : f32
      %17 = vector.broadcast %cst_14 : f32 to vector<16x64xf32>
      %18 = arith.maximumf %16, %17 : vector<16x64xf32>
      %c0_15 = arith.constant 0 : index
      %c0_16 = arith.constant 0 : index
      %19 = vector.load %arg6[%c0_15, %c0_16] : memref<16x64xf32, #tpu.memory_space<vmem>>, vector<16x64xf32>
      tpu.vector_store %arg6[%c0_15, %c0_16], %18 {strides = array<i32>} : memref<16x64xf32, #tpu.memory_space<vmem>>, vector<16x64xf32>,
    } else {
    }
    return
  }
  func.func @transform_0(%arg0: i32, %arg1: i32, %arg2: i32) -> (i32, i32) {
    %c0_i32 = arith.constant 0 : i32
    return %arg0, %arg2 : i32, i32
  }
  func.func @transform_1(%arg0: i32, %arg1: i32, %arg2: i32) -> (i32, i32) {
    %c0_i32 = arith.constant 0 : i32
    return %arg2, %arg1 : i32, i32
  }
  func.func @transform_2(%arg0: i32, %arg1: i32, %arg2: i32) -> (i32, i32) {
    %c0_i32 = arith.constant 0 : i32
    %c0_i32_0 = arith.constant 0 : i32
    return %c0_i32, %arg1 : i32, i32
  }
  func.func @transform_3(%arg0: i32, %arg1: i32, %arg2: i32) -> (i32, i32) {
    %c0_i32 = arith.constant 0 : i32
    return %arg0, %arg1 : i32, i32
  }
}

module attributes {stable_mosaic.version = 11 : i64} {
  func.func @_linear_kernel(%arg0: i32, %arg1: i32, %arg2: i32, %arg3: memref<16x32xf32, #tpu.memory_space<vmem>>, %arg4: memref<32x32xbf16, #tpu.memory_space<vmem>>, %arg5: memref<1x32xf32, #tpu.memory_space<vmem>>, %arg6: memref<16x32xf32, #tpu.memory_space<vmem>>, %arg7: memref<16x32xf32, #tpu.memory_space<vmem>>, %arg8: memref<16x32xf32, #tpu.memory_space<vmem>>) attributes {dimension_semantics = [#tpu.dimension_semantics<parallel>, #tpu.dimension_semantics<parallel>, #tpu.dimension_semantics<arbitrary>], iteration_bounds = array<i64: 1, 1, 1>, scalar_prefetch = 0 : i64, scratch_operands = 1 : i64, tpu.core_type = #tpu.core_type<tc>, window_params = [{transform_indices = @transform_0, window_bounds = array<i64: 16, 32>}, {transform_indices = @transform_1, window_bounds = array<i64: 32, 32>}, {transform_indices = @transform_2, window_bounds = array<i64: 1, 32>}, {transform_indices = @transform_3, window_bounds = array<i64: 16, 32>}, {transform_indices = @transform_4, window_bounds = array<i64: 16, 32>}]} {
    %c0_i32 = arith.constant 0 : i32
    %0 = arith.cmpi eq, %arg2, %c0_i32 : i32
    %1 = arith.extui %0 : i1 to i32
    %c0_i32_0 = arith.constant 0 : i32
    %2 = arith.cmpi ne, %1, %c0_i32_0 : i32
    scf.if %2 {
      %cst_10 = arith.constant 0.000000e+00 : f32
      %13 = vector.broadcast %cst_10 : f32 to vector<16x32xf32>
      %c0_11 = arith.constant 0 : index
      %c0_12 = arith.constant 0 : index
      %14 = vector.load %arg8[%c0_11, %c0_12] : memref<16x32xf32, #tpu.memory_space<vmem>>, vector<16x32xf32>
      tpu.vector_store %arg8[%c0_11, %c0_12], %13 {strides = array<i32>} : memref<16x32xf32, #tpu.memory_space<vmem>>, vector<16x32xf32>,
    } else {
    }
    %c0 = arith.constant 0 : index
    %c0_1 = arith.constant 0 : index
    %3 = vector.load %arg3[%c0, %c0_1] : memref<16x32xf32, #tpu.memory_space<vmem>>, vector<16x32xf32>
    %c0_2 = arith.constant 0 : index
    %c0_3 = arith.constant 0 : index
    %4 = vector.load %arg4[%c0_2, %c0_3] : memref<32x32xbf16, #tpu.memory_space<vmem>>, vector<32x32xbf16>
    %5 = arith.truncf %3 : vector<16x32xf32> to vector<16x32xbf16>
    %c0_4 = arith.constant 0 : index
    %c0_5 = arith.constant 0 : index
    %6 = vector.load %arg8[%c0_4, %c0_5] : memref<16x32xf32, #tpu.memory_space<vmem>>, vector<16x32xf32>
    %cst = arith.constant dense<0.000000e+00> : vector<16x32xf32>
    %7 = tpu.matmul %5, %4, %cst {dimension_numbers = #tpu.dot_dimension_numbers<[1], [0], [0], [1], [0, 0, 1, 1], [], []>} : vector<16x32xbf16>, vector<32x32xbf16>, vector<16x32xf32> -> vector<16x32xf32>
    %8 = arith.addf %6, %7 : vector<16x32xf32>
    %c0_6 = arith.constant 0 : index
    %c0_7 = arith.constant 0 : index
    %9 = vector.load %arg8[%c0_6, %c0_7] : memref<16x32xf32, #tpu.memory_space<vmem>>, vector<16x32xf32>
    tpu.vector_store %arg8[%c0_6, %c0_7], %8 {strides = array<i32>} : memref<16x32xf32, #tpu.memory_space<vmem>>, vector<16x32xf32>,
    %c0_i32_8 = arith.constant 0 : i32
    %10 = arith.cmpi eq, %arg2, %c0_i32_8 : i32
    %11 = arith.extui %10 : i1 to i32
    %c0_i32_9 = arith.constant 0 : i32
    %12 = arith.cmpi ne, %11, %c0_i32_9 : i32
    scf.if %12 {
      %c0_10 = arith.constant 0 : index
      %c0_11 = arith.constant 0 : index
      %13 = vector.load %arg8[%c0_10, %c0_11] : memref<16x32xf32, #tpu.memory_space<vmem>>, vector<16x32xf32>
      %c0_12 = arith.constant 0 : index
      %c0_13 = arith.constant 0 : index
      %14 = vector.load %arg5[%c0_12, %c0_13] : memref<1x32xf32, #tpu.memory_space<vmem>>, vector<1x32xf32>
      %15 = vector.broadcast %14 : vector<1x32xf32> to vector<16x32xf32>
      %16 = arith.addf %13, %15 : vector<16x32xf32>
      %c0_14 = arith.constant 0 : index
      %c0_15 = arith.constant 0 : index
      %17 = vector.load %arg6[%c0_14, %c0_15] : memref<16x32xf32, #tpu.memory_space<vmem>>, vector<16x32xf32>
      %18 = arith.addf %16, %17 : vector<16x32xf32>
      %c0_16 = arith.constant 0 : index
      %c0_17 = arith.constant 0 : index
      %19 = vector.load %arg7[%c0_16, %c0_17] : memref<16x32xf32, #tpu.memory_space<vmem>>, vector<16x32xf32>
      tpu.vector_store %arg7[%c0_16, %c0_17], %18 {strides = array<i32>} : memref<16x32xf32, #tpu.memory_space<vmem>>, vector<16x32xf32>,
    } else {
    }
    return
  }
  func.func @transform_0(%arg0: i32, %arg1: i32, %arg2: i32) -> (i32, i32) {
    %c0_i32 = arith.constant 0 : i32
    return %arg0, %arg2 : i32, i32
  }
  func.func @transform_1(%arg0: i32, %arg1: i32, %arg2: i32) -> (i32, i32) {
    %c0_i32 = arith.constant 0 : i32
    return %arg2, %arg1 : i32, i32
  }
  func.func @transform_2(%arg0: i32, %arg1: i32, %arg2: i32) -> (i32, i32) {
    %c0_i32 = arith.constant 0 : i32
    %c0_i32_0 = arith.constant 0 : i32
    return %c0_i32, %arg1 : i32, i32
  }
  func.func @transform_3(%arg0: i32, %arg1: i32, %arg2: i32) -> (i32, i32) {
    %c0_i32 = arith.constant 0 : i32
    return %arg0, %arg1 : i32, i32
  }
  func.func @transform_4(%arg0: i32, %arg1: i32, %arg2: i32) -> (i32, i32) {
    %c0_i32 = arith.constant 0 : i32
    return %arg0, %arg1 : i32, i32
  }
}

module attributes {stable_mosaic.version = 11 : i64} {
  func.func @_layernorm_kernel(%arg0: i32, %arg1: memref<16x32xf32, #tpu.memory_space<vmem>>, %arg2: memref<1x32xf32, #tpu.memory_space<vmem>>, %arg3: memref<1x32xf32, #tpu.memory_space<vmem>>, %arg4: memref<16x32xf32, #tpu.memory_space<vmem>>) attributes {dimension_semantics = [#tpu.dimension_semantics<parallel>], iteration_bounds = array<i64: 1>, scalar_prefetch = 0 : i64, scratch_operands = 0 : i64, tpu.core_type = #tpu.core_type<tc>, window_params = [{transform_indices = @transform_0, window_bounds = array<i64: 16, 32>}, {pipeline_mode = #tpu.pipeline_mode<synchronous>, transform_indices = @transform_1, window_bounds = array<i64: 1, 32>}, {pipeline_mode = #tpu.pipeline_mode<synchronous>, transform_indices = @transform_2, window_bounds = array<i64: 1, 32>}, {transform_indices = @transform_3, window_bounds = array<i64: 16, 32>}]} {
    %c0 = arith.constant 0 : index
    %c0_0 = arith.constant 0 : index
    %0 = vector.load %arg1[%c0, %c0_0] : memref<16x32xf32, #tpu.memory_space<vmem>>, vector<16x32xf32>
    %cst = arith.constant dense<0.000000e+00> : vector<16xf32>
    %1 = vector.multi_reduction <add>, %0, %cst [1] : vector<16x32xf32> to vector<16xf32>
    %2 = vector.shape_cast %1 : vector<16xf32> to vector<16x1xf32>
    %cst_1 = arith.constant 3.200000e+01 : f32
    %3 = vector.broadcast %cst_1 : f32 to vector<16x1xf32>
    %4 = arith.divf %2, %3 : vector<16x1xf32>
    %5 = vector.broadcast %4 : vector<16x1xf32> to vector<16x32xf32>
    %6 = arith.subf %0, %5 : vector<16x32xf32>
    %7 = arith.mulf %6, %6 : vector<16x32xf32>
    %cst_2 = arith.constant dense<0.000000e+00> : vector<16xf32>
    %8 = vector.multi_reduction <add>, %7, %cst_2 [1] : vector<16x32xf32> to vector<16xf32>
    %9 = vector.shape_cast %8 : vector<16xf32> to vector<16x1xf32>
    %cst_3 = arith.constant 3.100000e+01 : f32
    %10 = vector.broadcast %cst_3 : f32 to vector<16x1xf32>
    %11 = arith.divf %9, %10 : vector<16x1xf32>
    %12 = math.sqrt %11 : vector<16x1xf32>
    %cst_4 = arith.constant 9.99999997E-7 : f32
    %13 = vector.broadcast %cst_4 : f32 to vector<16x1xf32>
    %14 = arith.addf %12, %13 : vector<16x1xf32>
    %15 = tpu.reciprocal %14 : vector<16x1xf32> -> vector<16x1xf32>
    %c0_5 = arith.constant 0 : index
    %c0_6 = arith.constant 0 : index
    %16 = vector.load %arg2[%c0_5, %c0_6] : memref<1x32xf32, #tpu.memory_space<vmem>>, vector<1x32xf32>
    %17 = vector.broadcast %16 : vector<1x32xf32> to vector<16x32xf32>
    %18 = arith.mulf %17, %6 : vector<16x32xf32>
    %19 = vector.broadcast %15 : vector<16x1xf32> to vector<16x32xf32>
    %20 = arith.mulf %18, %19 : vector<16x32xf32>
    %c0_7 = arith.constant 0 : index
    %c0_8 = arith.constant 0 : index
    %21 = vector.load %arg3[%c0_7, %c0_8] : memref<1x32xf32, #tpu.memory_space<vmem>>, vector<1x32xf32>
    %22 = vector.broadcast %21 : vector<1x32xf32> to vector<16x32xf32>
    %23 = arith.addf %20, %22 : vector<16x32xf32>
    %c0_9 = arith.constant 0 : index
    %c0_10 = arith.constant 0 : index
    %24 = vector.load %arg4[%c0_9, %c0_10] : memref<16x32xf32, #tpu.memory_space<vmem>>, vector<16x32xf32>
    tpu.vector_store %arg4[%c0_9, %c0_10], %23 {strides = array<i32>} : memref<16x32xf32, #tpu.memory_space<vmem>>, vector<16x32xf32>,
    return
  }
  func.func @transform_0(%arg0: i32) -> (i32, i32) {
    %c0_i32 = arith.constant 0 : i32
    %c0_i32_0 = arith.constant 0 : i32
    return %arg0, %c0_i32 : i32, i32
  }
  func.func @transform_1(%arg0: i32) -> (i32, i32) {
    %c0_i32 = arith.constant 0 : i32
    %c0_i32_0 = arith.constant 0 : i32
    %c0_i32_1 = arith.constant 0 : i32
    return %c0_i32, %c0_i32_0 : i32, i32
  }
  func.func @transform_2(%arg0: i32) -> (i32, i32) {
    %c0_i32 = arith.constant 0 : i32
    %c0_i32_0 = arith.constant 0 : i32
    %c0_i32_1 = arith.constant 0 : i32
    return %c0_i32, %c0_i32_0 : i32, i32
  }
  func.func @transform_3(%arg0: i32) -> (i32, i32) {
    %c0_i32 = arith.constant 0 : i32
    %c0_i32_0 = arith.constant 0 : i32
    return %arg0, %c0_i32 : i32, i32
  }
}

</mosaic_0001>

<llo_original>
// kernel: _lambda_.15
$region0: #{_lambda_.15}
  #allocation0 [shape = 'u32[]', space=smem, size = 0x4, offset = 0x4, fixed_abs, tag = 'smem constant byte address 0x4 - core index']
  #allocation1 [shape = 'u32[144,128]{1,0:T(1,128)}', space=vmem, size = 0x12000, scoped, tag = 'internal scratch']
  %s0 = inlined_call_operand.vmem [shape: f32[16,32], index: 0, kind: input, shape index: {}]
  %s1 = inlined_call_operand.vmem [shape: f32[1,32], index: 1, kind: input, shape index: {}]
  %s2 = inlined_call_operand.vmem [shape: f32[1,32], index: 2, kind: input, shape index: {}]
  %s3 = inlined_call_operand.vmem [shape: f32[16,32], index: 3, kind: output, shape index: {}]
  %s4 = sld [smem:[#allocation0]]
  $region22: #{_lambda_.15} parent=0
    _
  %s6 = ssub.s32 1, %s4
  %s7 = scalar_select 0, %s6, %s4
  // Predicated region
  $region2: #{_lambda_.15} parent=0 // pred_check
    _
  $region3: #{_lambda_.15} parent=0 // pred_check_branch
    %9 = sbr.rel (0) target = $region5
  $region4: #{_lambda_.15} parent=0 // pred_region
    _
  $region5: #{_lambda_.15} parent=0 // pred_fallthru
    _
  // Predicated region
  $region6: #{_lambda_.15} parent=0 // pred_check
    _
  $region7: #{_lambda_.15} parent=0 // pred_check_branch
    %11 = sbr.rel (0) target = $region9
  $region8: #{_lambda_.15} parent=0 // pred_region
    _
  $region9: #{_lambda_.15} parent=0 // pred_fallthru
    _
  // Predicated region
  $region10: #{_lambda_.15} parent=0 // pred_check
    _
  $region11: #{_lambda_.15} parent=0 // pred_check_branch
    %13 = sbr.rel (0) target = $region13
  $region12: #{_lambda_.15} parent=0 // pred_region
    _
  $region13: #{_lambda_.15} parent=0 // pred_fallthru
    _
  %v14 = vld [vmem:[%s0] sm:$0xff]
  %v15 = vld [vmem:[%s0 + $0x8] sm:$0xff]
  %vm16 = vcmask 261120
  %v17 = vsel %vm16, %v14, 0.0
  %18 = vadd.xlane.f32.xlu0 %v17
  %v19 = vpop.xlane.xlu0 %18
  %v20 = vsel %vm16, %v15, 0.0
  %21 = vadd.xlane.f32.xlu0 %v20
  %v22 = vpop.xlane.xlu0 %21
  %v23 = vrcp.pop 32.0
  %v24 = vmul.f32 %v19, %v23
  %v25 = vmul.f32 %v22, %v23
  %v26 = vsub.f32 %v14, %v24
  %v27 = vsub.f32 %v15, %v25
  %v28 = vmul.f32 %v26, %v26
  %v29 = vmul.f32 %v27, %v27
  %v30 = vsel %vm16, %v28, 0.0
  %31 = vadd.xlane.f32.xlu0 %v30
  %v32 = vpop.xlane.xlu0 %31
  %v33 = vsel %vm16, %v29, 0.0
  %34 = vadd.xlane.f32.xlu0 %v33
  %v35 = vpop.xlane.xlu0 %34
  %v36 = vrcp.pop 31.0
  %v37 = vmul.f32 %v32, %v36
  %v38 = vmul.f32 %v35, %v36
  %v39 = vrsqrt.pop %v37
  %v40 = vmul.f32 %v37, %v39
  %vm41 = vcmp.eq.f32.partialorder %v37, inf
  %v42 = vsel %vm41, %v37, %v40
  %vm43 = vcmp.eq.f32.partialorder %v37, 0.0
  %v44 = vand.u32 %v37, 2147483648
  %v45 = vsel %vm43, %v44, %v42
  %v46 = vrsqrt.pop %v38
  %v47 = vmul.f32 %v38, %v46
  %vm48 = vcmp.eq.f32.partialorder %v38, inf
  %v49 = vsel %vm48, %v38, %v47
  %vm50 = vcmp.eq.f32.partialorder %v38, 0.0
  %v51 = vand.u32 %v38, 2147483648
  %v52 = vsel %vm50, %v51, %v49
  %v53 = vadd.f32 %v45, 1e-06
  %v54 = vadd.f32 %v52, 1e-06
  %v55 = vrcp.pop %v53
  %v56 = vrcp.pop %v54
  %v57 = vld [vmem:[%s1] sm:$0x1]
  %v59 = vlaneseq
  %v60 = vshrl.u32 %v59, 7
  %v61 = vsub.s32 0, %v60
  %v62 = vrot.slane %v57, %v61
  %v64 = vmul.f32 %v62, %v26
  %v65 = vmul.f32 %v62, %v27
  %v66 = vmul.f32 %v64, %v55
  %v67 = vmul.f32 %v65, %v56
  %v68 = vld [vmem:[%s2] sm:$0x1]
  %v70 = vlaneseq
  %v71 = vshrl.u32 %v70, 7
  %v72 = vsub.s32 0, %v71
  %v73 = vrot.slane %v68, %v72
  %v75 = vadd.f32 %v66, %v73
  %v76 = vadd.f32 %v67, %v73
  %77 = vst.msk [vmem:[%s3] sm:$0xff] %vm16, %v75
  %78 = vst.msk [vmem:[%s3 + $0x8] sm:$0xff] %vm16, %v76
  // Predicated region
  $region14: #{_lambda_.15} parent=0 // pred_check
    _
  $region15: #{_lambda_.15} parent=0 // pred_check_branch
    %80 = sbr.rel (0) target = $region17
  $region16: #{_lambda_.15} parent=0 // pred_region
    _
  $region17: #{_lambda_.15} parent=0 // pred_fallthru
    _
  // Predicated region
  $region18: #{_lambda_.15} parent=0 // pred_check
    _
  $region19: #{_lambda_.15} parent=0 // pred_check_branch
    %82 = sbr.rel (0) target = $region21
  $region20: #{_lambda_.15} parent=0 // pred_region
    _
  $region21: #{_lambda_.15} parent=0 // pred_fallthru
    _

// kernel: _lambda_.16
$region0: #{_lambda_.16}
  #allocation0 [shape = 'u32[]', space=smem, size = 0x4, offset = 0x4, fixed_abs, tag = 'smem constant byte address 0x4 - core index']
  #allocation1 [shape = 'u32[144,128]{1,0:T(1,128)}', space=vmem, size = 0x12000, scoped, tag = 'internal scratch']
  #allocation2 [shape = 'f32[16,96]{1,0:T(8,128)}', space=vmem, size = 0x2000, scoped, tag = 'scratch operand']
  %s0 = inlined_call_operand.vmem [shape: f32[16,32], index: 0, kind: input, shape index: {}]
  %s1 = inlined_call_operand.vmem [shape: bf16[32,96], index: 1, kind: input, shape index: {}]
  %s2 = inlined_call_operand.vmem [shape: f32[1,96], index: 2, kind: input, shape index: {}]
  %s3 = inlined_call_operand.vmem [shape: f32[16,96], index: 3, kind: output, shape index: {}]
  %s4 = sld [smem:[#allocation0]]
  $region30: #{_lambda_.16} parent=0
    _
  %s6 = ssub.s32 1, %s4
  %s7 = scalar_select 0, %s6, %s4
  // Predicated region
  $region2: #{_lambda_.16} parent=0 // pred_check
    _
  $region3: #{_lambda_.16} parent=0 // pred_check_branch
    %9 = sbr.rel (0) target = $region5
  $region4: #{_lambda_.16} parent=0 // pred_region
    _
  $region5: #{_lambda_.16} parent=0 // pred_fallthru
    _
  // Predicated region
  $region6: #{_lambda_.16} parent=0 // pred_check
    _
  $region7: #{_lambda_.16} parent=0 // pred_check_branch
    %11 = sbr.rel (0) target = $region9
  $region8: #{_lambda_.16} parent=0 // pred_region
    _
  $region9: #{_lambda_.16} parent=0 // pred_fallthru
    _
  // Predicated region
  $region10: #{_lambda_.16} parent=0 // pred_check
    _
  $region11: #{_lambda_.16} parent=0 // pred_check_branch
    %13 = sbr.rel (0) target = $region13
  $region12: #{_lambda_.16} parent=0 // pred_region
    _
  $region13: #{_lambda_.16} parent=0 // pred_fallthru
    _
  %p15 = scmp.eq.s32.totalorder 0, 0
  // Predicated region
  $region14: #{_lambda_.16} parent=0 // pred_check
    %p16 = pneg %p15
  $region15: #{_lambda_.16} parent=0 // pred_check_branch
    %18 = sbr.rel (%p16) target = $region17
  $region16: #{_lambda_.16} parent=0 // pred_region
    %vm19 = vcmask 785408
    %20 = vst.msk [vmem:[#allocation2] sm:$0xff] %vm19, 0.0
    %21 = vst.msk [vmem:[#allocation2 + $0x8] sm:$0xff] %vm19, 0.0
  $region17: #{_lambda_.16} parent=0 // pred_fallthru
    _
  %v22 = vld [vmem:[%s0] sm:$0xff]
  %v23 = vld [vmem:[%s0 + $0x8] sm:$0xff]
  %v24 = vld [vmem:[%s1] sm:$0xf]
  %v25 = vld [vmem:[%s1 + $0x4] sm:$0xf]
  %v26 = vld [vmem:[%s1 + $0x8] sm:$0xf]
  %v27 = vld [vmem:[%s1 + $0xc] sm:$0xf]
  %v28 = vpack.c.bf16 %v23, %v22
  %v29 = vld [vmem:[#allocation2] sm:$0xff]
  %v30 = vld [vmem:[#allocation2 + $0x8] sm:$0xff]
  %v35 = vunpack.c.l.b16 %v24
  %v36 = vunpack.c.l.b16 %v25
  %v37 = vunpack.c.l.b16 %v26
  %v38 = vunpack.c.l.b16 %v27
  %v39 = vpack.c.b16 %v36, %v35
  %v40 = vpack.c.b16 %v38, %v37
  %vm43 = vcmask 261120
  %v45 = vsel %vm43, %v28, 0
  %47 = vmatprep.subr.bf16.mxu0 0
  %48 = vmatpush1.bf16.msra.mxu0 %v39
  %49 = vmatprep.subr.bf16.mxu0 0
  %50 = vmatpush1.bf16.msra.mxu0 %v40
  %51 = vmatprep.subr.bf16.mxu0 0
  %52 = vmatpush1.bf16.msra.mxu0 0
  %53 = vmatprep.subr.bf16.mxu0 0
  %54 = vmatpush1.bf16.msra.mxu0 0
  %55 = vmatprep.subr.bf16.mxu0 0
  %56 = vmatpush1.bf16.msra.mxu0 0
  %57 = vmatprep.subr.bf16.mxu0 0
  %58 = vmatpush1.bf16.msra.mxu0 0
  %59 = vmatprep.subr.bf16.mxu0 0
  %60 = vmatpush1.bf16.msra.mxu0 0
  %61 = vmatprep.subr.bf16.mxu0 0
  %62 = vmatpush1.bf16.msra.mxu0 0
  %63 = vmatprep.subr.bf16.mxu0 0
  %64 = vmatpush1.bf16.msra.mxu0 0
  %65 = vmatprep.subr.bf16.mxu0 0
  %66 = vmatpush1.bf16.msra.mxu0 0
  %67 = vmatprep.subr.bf16.mxu0 0
  %68 = vmatpush1.bf16.msra.mxu0 0
  %69 = vmatprep.subr.bf16.mxu0 0
  %70 = vmatpush1.bf16.msra.mxu0 0
  %71 = vmatprep.subr.bf16.mxu0 0
  %72 = vmatpush1.bf16.msra.mxu0 0
  %73 = vmatprep.subr.bf16.mxu0 0
  %74 = vmatpush1.bf16.msra.mxu0 0
  %75 = vmatprep.subr.bf16.mxu0 0
  %76 = vmatpush1.bf16.msra.mxu0 0
  %77 = vmatprep.subr.bf16.mxu0 0
  %78 = vmatpush1.bf16.msra.mxu0 0
  %79 = vmatprep.mubr.bf16.mxu0 0
  %80 = vmatmul.mubr.bf16.gmra.mrb[0].mxu0 %v45
  %v81 = vpop.f32.mrb[0].mxu0
  %v82 = vadd.f32 0.0, %v81
  %v83 = vpop.f32.mrb[0].mxu0
  %v84 = vpop.f32.mrb[0].mxu0
  %v85 = vadd.f32 0.0, %v84
  %v86 = vpop.f32.mrb[0].mxu0
  %87 = vdwg.mxu0
  %v88 = vadd.f32 %v29, %v82
  %v89 = vadd.f32 %v30, %v85
  %vm90 = vcmask 785408
  %91 = vst.msk [vmem:[#allocation2] sm:$0xff] %vm90, %v88
  %92 = vst.msk [vmem:[#allocation2 + $0x8] sm:$0xff] %vm90, %v89
  // Predicated region
  $region18: #{_lambda_.16} parent=0 // pred_check
    %p93 = pneg %p15
  $region19: #{_lambda_.16} parent=0 // pred_check_branch
    %95 = sbr.rel (%p93) target = $region21
  $region20: #{_lambda_.16} parent=0 // pred_region
    %v96 = vld [vmem:[#allocation2] sm:$0xff]
    %v97 = vld [vmem:[#allocation2 + $0x8] sm:$0xff]
    %v98 = vld [vmem:[%s2] sm:$0x1]
    %v100 = vlaneseq
    %v101 = vshrl.u32 %v100, 7
    %v102 = vsub.s32 0, %v101
    %v103 = vrot.slane %v98, %v102
    %v105 = vadd.f32 %v96, %v103
    %v106 = vadd.f32 %v97, %v103
    %107 = vst.msk [vmem:[%s3] sm:$0xff] %vm90, %v105
    %108 = vst.msk [vmem:[%s3 + $0x8] sm:$0xff] %vm90, %v106
  $region21: #{_lambda_.16} parent=0 // pred_fallthru
    _
  // Predicated region
  $region22: #{_lambda_.16} parent=0 // pred_check
    _
  $region23: #{_lambda_.16} parent=0 // pred_check_branch
    %110 = sbr.rel (0) target = $region25
  $region24: #{_lambda_.16} parent=0 // pred_region
    _
  $region25: #{_lambda_.16} parent=0 // pred_fallthru
    _
  // Predicated region
  $region26: #{_lambda_.16} parent=0 // pred_check
    _
  $region27: #{_lambda_.16} parent=0 // pred_check_branch
    %112 = sbr.rel (0) target = $region29
  $region28: #{_lambda_.16} parent=0 // pred_region
    _
  $region29: #{_lambda_.16} parent=0 // pred_fallthru
    _

// kernel: _lambda_.21
$region0: #{_lambda_.21}
  #allocation0 [shape = 'u32[]', space=smem, size = 0x4, offset = 0x4, fixed_abs, tag = 'smem constant byte address 0x4 - core index']
  #allocation1 [shape = 'u32[144,128]{1,0:T(1,128)}', space=vmem, size = 0x12000, scoped, tag = 'internal scratch']
  #allocation2 [shape = 'f32[16,32]{1,0:T(8,128)}', space=vmem, size = 0x2000, scoped, tag = 'scratch operand']
  %s0 = inlined_call_operand.vmem [shape: f32[16,64], index: 0, kind: input, shape index: {}]
  %s1 = inlined_call_operand.vmem [shape: bf16[64,32], index: 1, kind: input, shape index: {}]
  %s2 = inlined_call_operand.vmem [shape: f32[1,32], index: 2, kind: input, shape index: {}]
  %s3 = inlined_call_operand.vmem [shape: f32[16,32], index: 3, kind: input, shape index: {}]
  %s4 = inlined_call_operand.vmem [shape: f32[16,32], index: 4, kind: output, shape index: {}]
  %s5 = sld [smem:[#allocation0]]
  $region34: #{_lambda_.21} parent=0
    _
  %s7 = ssub.s32 1, %s5
  %s8 = scalar_select 0, %s7, %s5
  // Predicated region
  $region2: #{_lambda_.21} parent=0 // pred_check
    _
  $region3: #{_lambda_.21} parent=0 // pred_check_branch
    %10 = sbr.rel (0) target = $region5
  $region4: #{_lambda_.21} parent=0 // pred_region
    _
  $region5: #{_lambda_.21} parent=0 // pred_fallthru
    _
  // Predicated region
  $region6: #{_lambda_.21} parent=0 // pred_check
    _
  $region7: #{_lambda_.21} parent=0 // pred_check_branch
    %12 = sbr.rel (0) target = $region9
  $region8: #{_lambda_.21} parent=0 // pred_region
    _
  $region9: #{_lambda_.21} parent=0 // pred_fallthru
    _
  // Predicated region
  $region10: #{_lambda_.21} parent=0 // pred_check
    _
  $region11: #{_lambda_.21} parent=0 // pred_check_branch
    %14 = sbr.rel (0) target = $region13
  $region12: #{_lambda_.21} parent=0 // pred_region
    _
  $region13: #{_lambda_.21} parent=0 // pred_fallthru
    _
  // Predicated region
  $region14: #{_lambda_.21} parent=0 // pred_check
    _
  $region15: #{_lambda_.21} parent=0 // pred_check_branch
    %16 = sbr.rel (0) target = $region17
  $region16: #{_lambda_.21} parent=0 // pred_region
    _
  $region17: #{_lambda_.21} parent=0 // pred_fallthru
    _
  %p18 = scmp.eq.s32.totalorder 0, 0
  // Predicated region
  $region18: #{_lambda_.21} parent=0 // pred_check
    %p19 = pneg %p18
  $region19: #{_lambda_.21} parent=0 // pred_check_branch
    %21 = sbr.rel (%p19) target = $region21
  $region20: #{_lambda_.21} parent=0 // pred_region
    %vm22 = vcmask 261120
    %23 = vst.msk [vmem:[#allocation2] sm:$0xff] %vm22, 0.0
    %24 = vst.msk [vmem:[#allocation2 + $0x8] sm:$0xff] %vm22, 0.0
  $region21: #{_lambda_.21} parent=0 // pred_fallthru
    _
  %v25 = vld [vmem:[%s0] sm:$0xff]
  %v26 = vld [vmem:[%s0 + $0x8] sm:$0xff]
  %v27 = vld [vmem:[%s1] sm:$0xf]
  %v28 = vld [vmem:[%s1 + $0x4] sm:$0xf]
  %v29 = vld [vmem:[%s1 + $0x8] sm:$0xf]
  %v30 = vld [vmem:[%s1 + $0xc] sm:$0xf]
  %v31 = vld [vmem:[%s1 + $0x10] sm:$0xf]
  %v32 = vld [vmem:[%s1 + $0x14] sm:$0xf]
  %v33 = vld [vmem:[%s1 + $0x18] sm:$0xf]
  %v34 = vld [vmem:[%s1 + $0x1c] sm:$0xf]
  %v35 = vpack.c.bf16 %v26, %v25
  %v36 = vld [vmem:[#allocation2] sm:$0xff]
  %v37 = vld [vmem:[#allocation2 + $0x8] sm:$0xff]
  %v46 = vunpack.c.l.b16 %v27
  %v47 = vunpack.c.l.b16 %v28
  %v48 = vunpack.c.l.b16 %v29
  %v49 = vunpack.c.l.b16 %v30
  %v50 = vunpack.c.l.b16 %v31
  %v51 = vunpack.c.l.b16 %v32
  %v52 = vunpack.c.l.b16 %v33
  %v53 = vunpack.c.l.b16 %v34
  %v54 = vpack.c.b16 %v47, %v46
  %v55 = vpack.c.b16 %v49, %v48
  %v56 = vpack.c.b16 %v51, %v50
  %v57 = vpack.c.b16 %v53, %v52
  %vm62 = vcmask 523264
  %v64 = vsel %vm62, %v35, 0
  %66 = vmatprep.subr.bf16.mxu0 0
  %67 = vmatpush1.bf16.msra.mxu0 %v54
  %68 = vmatprep.subr.bf16.mxu0 0
  %69 = vmatpush1.bf16.msra.mxu0 %v55
  %70 = vmatprep.subr.bf16.mxu0 0
  %71 = vmatpush1.bf16.msra.mxu0 %v56
  %72 = vmatprep.subr.bf16.mxu0 0
  %73 = vmatpush1.bf16.msra.mxu0 %v57
  %74 = vmatprep.subr.bf16.mxu0 0
  %75 = vmatpush1.bf16.msra.mxu0 0
  %76 = vmatprep.subr.bf16.mxu0 0
  %77 = vmatpush1.bf16.msra.mxu0 0
  %78 = vmatprep.subr.bf16.mxu0 0
  %79 = vmatpush1.bf16.msra.mxu0 0
  %80 = vmatprep.subr.bf16.mxu0 0
  %81 = vmatpush1.bf16.msra.mxu0 0
  %82 = vmatprep.subr.bf16.mxu0 0
  %83 = vmatpush1.bf16.msra.mxu0 0
  %84 = vmatprep.subr.bf16.mxu0 0
  %85 = vmatpush1.bf16.msra.mxu0 0
  %86 = vmatprep.subr.bf16.mxu0 0
  %87 = vmatpush1.bf16.msra.mxu0 0
  %88 = vmatprep.subr.bf16.mxu0 0
  %89 = vmatpush1.bf16.msra.mxu0 0
  %90 = vmatprep.subr.bf16.mxu0 0
  %91 = vmatpush1.bf16.msra.mxu0 0
  %92 = vmatprep.subr.bf16.mxu0 0
  %93 = vmatpush1.bf16.msra.mxu0 0
  %94 = vmatprep.subr.bf16.mxu0 0
  %95 = vmatpush1.bf16.msra.mxu0 0
  %96 = vmatprep.subr.bf16.mxu0 0
  %97 = vmatpush1.bf16.msra.mxu0 0
  %98 = vmatprep.mubr.bf16.mxu0 0
  %99 = vmatmul.mubr.bf16.gmra.mrb[0].mxu0 %v64
  %v100 = vpop.f32.mrb[0].mxu0
  %v101 = vadd.f32 0.0, %v100
  %v102 = vpop.f32.mrb[0].mxu0
  %v103 = vpop.f32.mrb[0].mxu0
  %v104 = vadd.f32 0.0, %v103
  %v105 = vpop.f32.mrb[0].mxu0
  %106 = vdwg.mxu0
  %v107 = vadd.f32 %v36, %v101
  %v108 = vadd.f32 %v37, %v104
  %vm109 = vcmask 261120
  %110 = vst.msk [vmem:[#allocation2] sm:$0xff] %vm109, %v107
  %111 = vst.msk [vmem:[#allocation2 + $0x8] sm:$0xff] %vm109, %v108
  // Predicated region
  $region22: #{_lambda_.21} parent=0 // pred_check
    %p112 = pneg %p18
  $region23: #{_lambda_.21} parent=0 // pred_check_branch
    %114 = sbr.rel (%p112) target = $region25
  $region24: #{_lambda_.21} parent=0 // pred_region
    %v115 = vld [vmem:[#allocation2] sm:$0xff]
    %v116 = vld [vmem:[#allocation2 + $0x8] sm:$0xff]
    %v117 = vld [vmem:[%s2] sm:$0x1]
    %v119 = vlaneseq
    %v120 = vshrl.u32 %v119, 7
    %v121 = vsub.s32 0, %v120
    %v122 = vrot.slane %v117, %v121
    %v124 = vadd.f32 %v115, %v122
    %v125 = vadd.f32 %v116, %v122
    %v126 = vld [vmem:[%s3] sm:$0xff]
    %v127 = vld [vmem:[%s3 + $0x8] sm:$0xff]
    %v128 = vadd.f32 %v124, %v126
    %v129 = vadd.f32 %v125, %v127
    %130 = vst.msk [vmem:[%s4] sm:$0xff] %vm109, %v128
    %131 = vst.msk [vmem:[%s4 + $0x8] sm:$0xff] %vm109, %v129
  $region25: #{_lambda_.21} parent=0 // pred_fallthru
    _
  // Predicated region
  $region26: #{_lambda_.21} parent=0 // pred_check
    _
  $region27: #{_lambda_.21} parent=0 // pred_check_branch
    %133 = sbr.rel (0) target = $region29
  $region28: #{_lambda_.21} parent=0 // pred_region
    _
  $region29: #{_lambda_.21} parent=0 // pred_fallthru
    _
  // Predicated region
  $region30: #{_lambda_.21} parent=0 // pred_check
    _
  $region31: #{_lambda_.21} parent=0 // pred_check_branch
    %135 = sbr.rel (0) target = $region33
  $region32: #{_lambda_.21} parent=0 // pred_region
    _
  $region33: #{_lambda_.21} parent=0 // pred_fallthru
    _

// kernel: _lambda_.18
$region0: #{_lambda_.18}
  #allocation0 [shape = 'u32[]', space=smem, size = 0x4, offset = 0x4, fixed_abs, tag = 'smem constant byte address 0x4 - core index']
  #allocation1 [shape = 'u32[144,128]{1,0:T(1,128)}', space=vmem, size = 0x12000, scoped, tag = 'internal scratch']
  #allocation2 [shape = 'f32[16,32]{1,0:T(8,128)}', space=vmem, size = 0x2000, scoped, tag = 'scratch operand']
  %s0 = inlined_call_operand.vmem [shape: f32[16,32], index: 0, kind: input, shape index: {}]
  %s1 = inlined_call_operand.vmem [shape: bf16[32,32], index: 1, kind: input, shape index: {}]
  %s2 = inlined_call_operand.vmem [shape: f32[1,32], index: 2, kind: input, shape index: {}]
  %s3 = inlined_call_operand.vmem [shape: f32[16,32], index: 3, kind: input, shape index: {}]
  %s4 = inlined_call_operand.vmem [shape: f32[16,32], index: 4, kind: output, shape index: {}]
  %s5 = sld [smem:[#allocation0]]
  $region34: #{_lambda_.18} parent=0
    _
  %s7 = ssub.s32 1, %s5
  %s8 = scalar_select 0, %s7, %s5
  // Predicated region
  $region2: #{_lambda_.18} parent=0 // pred_check
    _
  $region3: #{_lambda_.18} parent=0 // pred_check_branch
    %10 = sbr.rel (0) target = $region5
  $region4: #{_lambda_.18} parent=0 // pred_region
    _
  $region5: #{_lambda_.18} parent=0 // pred_fallthru
    _
  // Predicated region
  $region6: #{_lambda_.18} parent=0 // pred_check
    _
  $region7: #{_lambda_.18} parent=0 // pred_check_branch
    %12 = sbr.rel (0) target = $region9
  $region8: #{_lambda_.18} parent=0 // pred_region
    _
  $region9: #{_lambda_.18} parent=0 // pred_fallthru
    _
  // Predicated region
  $region10: #{_lambda_.18} parent=0 // pred_check
    _
  $region11: #{_lambda_.18} parent=0 // pred_check_branch
    %14 = sbr.rel (0) target = $region13
  $region12: #{_lambda_.18} parent=0 // pred_region
    _
  $region13: #{_lambda_.18} parent=0 // pred_fallthru
    _
  // Predicated region
  $region14: #{_lambda_.18} parent=0 // pred_check
    _
  $region15: #{_lambda_.18} parent=0 // pred_check_branch
    %16 = sbr.rel (0) target = $region17
  $region16: #{_lambda_.18} parent=0 // pred_region
    _
  $region17: #{_lambda_.18} parent=0 // pred_fallthru
    _
  %p18 = scmp.eq.s32.totalorder 0, 0
  // Predicated region
  $region18: #{_lambda_.18} parent=0 // pred_check
    %p19 = pneg %p18
  $region19: #{_lambda_.18} parent=0 // pred_check_branch
    %21 = sbr.rel (%p19) target = $region21
  $region20: #{_lambda_.18} parent=0 // pred_region
    %vm22 = vcmask 261120
    %23 = vst.msk [vmem:[#allocation2] sm:$0xff] %vm22, 0.0
    %24 = vst.msk [vmem:[#allocation2 + $0x8] sm:$0xff] %vm22, 0.0
  $region21: #{_lambda_.18} parent=0 // pred_fallthru
    _
  %v25 = vld [vmem:[%s0] sm:$0xff]
  %v26 = vld [vmem:[%s0 + $0x8] sm:$0xff]
  %v27 = vld [vmem:[%s1] sm:$0xf]
  %v28 = vld [vmem:[%s1 + $0x4] sm:$0xf]
  %v29 = vld [vmem:[%s1 + $0x8] sm:$0xf]
  %v30 = vld [vmem:[%s1 + $0xc] sm:$0xf]
  %v31 = vpack.c.bf16 %v26, %v25
  %v32 = vld [vmem:[#allocation2] sm:$0xff]
  %v33 = vld [vmem:[#allocation2 + $0x8] sm:$0xff]
  %v38 = vunpack.c.l.b16 %v27
  %v39 = vunpack.c.l.b16 %v28
  %v40 = vunpack.c.l.b16 %v29
  %v41 = vunpack.c.l.b16 %v30
  %v42 = vpack.c.b16 %v39, %v38
  %v43 = vpack.c.b16 %v41, %v40
  %vm46 = vcmask 261120
  %v48 = vsel %vm46, %v31, 0
  %50 = vmatprep.subr.bf16.mxu0 0
  %51 = vmatpush1.bf16.msra.mxu0 %v42
  %52 = vmatprep.subr.bf16.mxu0 0
  %53 = vmatpush1.bf16.msra.mxu0 %v43
  %54 = vmatprep.subr.bf16.mxu0 0
  %55 = vmatpush1.bf16.msra.mxu0 0
  %56 = vmatprep.subr.bf16.mxu0 0
  %57 = vmatpush1.bf16.msra.mxu0 0
  %58 = vmatprep.subr.bf16.mxu0 0
  %59 = vmatpush1.bf16.msra.mxu0 0
  %60 = vmatprep.subr.bf16.mxu0 0
  %61 = vmatpush1.bf16.msra.mxu0 0
  %62 = vmatprep.subr.bf16.mxu0 0
  %63 = vmatpush1.bf16.msra.mxu0 0
  %64 = vmatprep.subr.bf16.mxu0 0
  %65 = vmatpush1.bf16.msra.mxu0 0
  %66 = vmatprep.subr.bf16.mxu0 0
  %67 = vmatpush1.bf16.msra.mxu0 0
  %68 = vmatprep.subr.bf16.mxu0 0
  %69 = vmatpush1.bf16.msra.mxu0 0
  %70 = vmatprep.subr.bf16.mxu0 0
  %71 = vmatpush1.bf16.msra.mxu0 0
  %72 = vmatprep.subr.bf16.mxu0 0
  %73 = vmatpush1.bf16.msra.mxu0 0
  %74 = vmatprep.subr.bf16.mxu0 0
  %75 = vmatpush1.bf16.msra.mxu0 0
  %76 = vmatprep.subr.bf16.mxu0 0
  %77 = vmatpush1.bf16.msra.mxu0 0
  %78 = vmatprep.subr.bf16.mxu0 0
  %79 = vmatpush1.bf16.msra.mxu0 0
  %80 = vmatprep.subr.bf16.mxu0 0
  %81 = vmatpush1.bf16.msra.mxu0 0
  %82 = vmatprep.mubr.bf16.mxu0 0
  %83 = vmatmul.mubr.bf16.gmra.mrb[0].mxu0 %v48
  %v84 = vpop.f32.mrb[0].mxu0
  %v85 = vadd.f32 0.0, %v84
  %v86 = vpop.f32.mrb[0].mxu0
  %v87 = vpop.f32.mrb[0].mxu0
  %v88 = vadd.f32 0.0, %v87
  %v89 = vpop.f32.mrb[0].mxu0
  %90 = vdwg.mxu0
  %v91 = vadd.f32 %v32, %v85
  %v92 = vadd.f32 %v33, %v88
  %93 = vst.msk [vmem:[#allocation2] sm:$0xff] %vm46, %v91
  %94 = vst.msk [vmem:[#allocation2 + $0x8] sm:$0xff] %vm46, %v92
  // Predicated region
  $region22: #{_lambda_.18} parent=0 // pred_check
    %p95 = pneg %p18
  $region23: #{_lambda_.18} parent=0 // pred_check_branch
    %97 = sbr.rel (%p95) target = $region25
  $region24: #{_lambda_.18} parent=0 // pred_region
    %v98 = vld [vmem:[#allocation2] sm:$0xff]
    %v99 = vld [vmem:[#allocation2 + $0x8] sm:$0xff]
    %v100 = vld [vmem:[%s2] sm:$0x1]
    %v102 = vlaneseq
    %v103 = vshrl.u32 %v102, 7
    %v104 = vsub.s32 0, %v103
    %v105 = vrot.slane %v100, %v104
    %v107 = vadd.f32 %v98, %v105
    %v108 = vadd.f32 %v99, %v105
    %v109 = vld [vmem:[%s3] sm:$0xff]
    %v110 = vld [vmem:[%s3 + $0x8] sm:$0xff]
    %v111 = vadd.f32 %v107, %v109
    %v112 = vadd.f32 %v108, %v110
    %113 = vst.msk [vmem:[%s4] sm:$0xff] %vm46, %v111
    %114 = vst.msk [vmem:[%s4 + $0x8] sm:$0xff] %vm46, %v112
  $region25: #{_lambda_.18} parent=0 // pred_fallthru
    _
  // Predicated region
  $region26: #{_lambda_.18} parent=0 // pred_check
    _
  $region27: #{_lambda_.18} parent=0 // pred_check_branch
    %116 = sbr.rel (0) target = $region29
  $region28: #{_lambda_.18} parent=0 // pred_region
    _
  $region29: #{_lambda_.18} parent=0 // pred_fallthru
    _
  // Predicated region
  $region30: #{_lambda_.18} parent=0 // pred_check
    _
  $region31: #{_lambda_.18} parent=0 // pred_check_branch
    %118 = sbr.rel (0) target = $region33
  $region32: #{_lambda_.18} parent=0 // pred_region
    _
  $region33: #{_lambda_.18} parent=0 // pred_fallthru
    _

// kernel: _lambda_.20
$region0: #{_lambda_.20}
  #allocation0 [shape = 'u32[]', space=smem, size = 0x4, offset = 0x4, fixed_abs, tag = 'smem constant byte address 0x4 - core index']
  #allocation1 [shape = 'u32[144,128]{1,0:T(1,128)}', space=vmem, size = 0x12000, scoped, tag = 'internal scratch']
  #allocation2 [shape = 'f32[16,64]{1,0:T(8,128)}', space=vmem, size = 0x2000, scoped, tag = 'scratch operand']
  %s0 = inlined_call_operand.vmem [shape: f32[16,32], index: 0, kind: input, shape index: {}]
  %s1 = inlined_call_operand.vmem [shape: bf16[32,64], index: 1, kind: input, shape index: {}]
  %s2 = inlined_call_operand.vmem [shape: f32[1,64], index: 2, kind: input, shape index: {}]
  %s3 = inlined_call_operand.vmem [shape: f32[16,64], index: 3, kind: output, shape index: {}]
  %s4 = sld [smem:[#allocation0]]
  $region30: #{_lambda_.20} parent=0
    _
  %s6 = ssub.s32 1, %s4
  %s7 = scalar_select 0, %s6, %s4
  // Predicated region
  $region2: #{_lambda_.20} parent=0 // pred_check
    _
  $region3: #{_lambda_.20} parent=0 // pred_check_branch
    %9 = sbr.rel (0) target = $region5
  $region4: #{_lambda_.20} parent=0 // pred_region
    _
  $region5: #{_lambda_.20} parent=0 // pred_fallthru
    _
  // Predicated region
  $region6: #{_lambda_.20} parent=0 // pred_check
    _
  $region7: #{_lambda_.20} parent=0 // pred_check_branch
    %11 = sbr.rel (0) target = $region9
  $region8: #{_lambda_.20} parent=0 // pred_region
    _
  $region9: #{_lambda_.20} parent=0 // pred_fallthru
    _
  // Predicated region
  $region10: #{_lambda_.20} parent=0 // pred_check
    _
  $region11: #{_lambda_.20} parent=0 // pred_check_branch
    %13 = sbr.rel (0) target = $region13
  $region12: #{_lambda_.20} parent=0 // pred_region
    _
  $region13: #{_lambda_.20} parent=0 // pred_fallthru
    _
  %p15 = scmp.eq.s32.totalorder 0, 0
  // Predicated region
  $region14: #{_lambda_.20} parent=0 // pred_check
    %p16 = pneg %p15
  $region15: #{_lambda_.20} parent=0 // pred_check_branch
    %18 = sbr.rel (%p16) target = $region17
  $region16: #{_lambda_.20} parent=0 // pred_region
    %vm19 = vcmask 523264
    %20 = vst.msk [vmem:[#allocation2] sm:$0xff] %vm19, 0.0
    %21 = vst.msk [vmem:[#allocation2 + $0x8] sm:$0xff] %vm19, 0.0
  $region17: #{_lambda_.20} parent=0 // pred_fallthru
    _
  %v22 = vld [vmem:[%s0] sm:$0xff]
  %v23 = vld [vmem:[%s0 + $0x8] sm:$0xff]
  %v24 = vld [vmem:[%s1] sm:$0xf]
  %v25 = vld [vmem:[%s1 + $0x4] sm:$0xf]
  %v26 = vld [vmem:[%s1 + $0x8] sm:$0xf]
  %v27 = vld [vmem:[%s1 + $0xc] sm:$0xf]
  %v28 = vpack.c.bf16 %v23, %v22
  %v29 = vld [vmem:[#allocation2] sm:$0xff]
  %v30 = vld [vmem:[#allocation2 + $0x8] sm:$0xff]
  %v35 = vunpack.c.l.b16 %v24
  %v36 = vunpack.c.l.b16 %v25
  %v37 = vunpack.c.l.b16 %v26
  %v38 = vunpack.c.l.b16 %v27
  %v39 = vpack.c.b16 %v36, %v35
  %v40 = vpack.c.b16 %v38, %v37
  %vm43 = vcmask 261120
  %v45 = vsel %vm43, %v28, 0
  %47 = vmatprep.subr.bf16.mxu0 0
  %48 = vmatpush1.bf16.msra.mxu0 %v39
  %49 = vmatprep.subr.bf16.mxu0 0
  %50 = vmatpush1.bf16.msra.mxu0 %v40
  %51 = vmatprep.subr.bf16.mxu0 0
  %52 = vmatpush1.bf16.msra.mxu0 0
  %53 = vmatprep.subr.bf16.mxu0 0
  %54 = vmatpush1.bf16.msra.mxu0 0
  %55 = vmatprep.subr.bf16.mxu0 0
  %56 = vmatpush1.bf16.msra.mxu0 0
  %57 = vmatprep.subr.bf16.mxu0 0
  %58 = vmatpush1.bf16.msra.mxu0 0
  %59 = vmatprep.subr.bf16.mxu0 0
  %60 = vmatpush1.bf16.msra.mxu0 0
  %61 = vmatprep.subr.bf16.mxu0 0
  %62 = vmatpush1.bf16.msra.mxu0 0
  %63 = vmatprep.subr.bf16.mxu0 0
  %64 = vmatpush1.bf16.msra.mxu0 0
  %65 = vmatprep.subr.bf16.mxu0 0
  %66 = vmatpush1.bf16.msra.mxu0 0
  %67 = vmatprep.subr.bf16.mxu0 0
  %68 = vmatpush1.bf16.msra.mxu0 0
  %69 = vmatprep.subr.bf16.mxu0 0
  %70 = vmatpush1.bf16.msra.mxu0 0
  %71 = vmatprep.subr.bf16.mxu0 0
  %72 = vmatpush1.bf16.msra.mxu0 0
  %73 = vmatprep.subr.bf16.mxu0 0
  %74 = vmatpush1.bf16.msra.mxu0 0
  %75 = vmatprep.subr.bf16.mxu0 0
  %76 = vmatpush1.bf16.msra.mxu0 0
  %77 = vmatprep.subr.bf16.mxu0 0
  %78 = vmatpush1.bf16.msra.mxu0 0
  %79 = vmatprep.mubr.bf16.mxu0 0
  %80 = vmatmul.mubr.bf16.gmra.mrb[0].mxu0 %v45
  %v81 = vpop.f32.mrb[0].mxu0
  %v82 = vadd.f32 0.0, %v81
  %v83 = vpop.f32.mrb[0].mxu0
  %v84 = vpop.f32.mrb[0].mxu0
  %v85 = vadd.f32 0.0, %v84
  %v86 = vpop.f32.mrb[0].mxu0
  %87 = vdwg.mxu0
  %v88 = vadd.f32 %v29, %v82
  %v89 = vadd.f32 %v30, %v85
  %vm90 = vcmask 523264
  %91 = vst.msk [vmem:[#allocation2] sm:$0xff] %vm90, %v88
  %92 = vst.msk [vmem:[#allocation2 + $0x8] sm:$0xff] %vm90, %v89
  // Predicated region
  $region18: #{_lambda_.20} parent=0 // pred_check
    %p93 = pneg %p15
  $region19: #{_lambda_.20} parent=0 // pred_check_branch
    %95 = sbr.rel (%p93) target = $region21
  $region20: #{_lambda_.20} parent=0 // pred_region
    %v96 = vld [vmem:[#allocation2] sm:$0xff]
    %v97 = vld [vmem:[#allocation2 + $0x8] sm:$0xff]
    %v98 = vld [vmem:[%s2] sm:$0x1]
    %v100 = vlaneseq
    %v101 = vshrl.u32 %v100, 7
    %v102 = vsub.s32 0, %v101
    %v103 = vrot.slane %v98, %v102
    %v105 = vadd.f32 %v96, %v103
    %v106 = vadd.f32 %v97, %v103
    %v107 = vmax.f32 %v105, 0.0
    %v108 = vmax.f32 %v106, 0.0
    %109 = vst.msk [vmem:[%s3] sm:$0xff] %vm90, %v107
    %110 = vst.msk [vmem:[%s3 + $0x8] sm:$0xff] %vm90, %v108
  $region21: #{_lambda_.20} parent=0 // pred_fallthru
    _
  // Predicated region
  $region22: #{_lambda_.20} parent=0 // pred_check
    _
  $region23: #{_lambda_.20} parent=0 // pred_check_branch
    %112 = sbr.rel (0) target = $region25
  $region24: #{_lambda_.20} parent=0 // pred_region
    _
  $region25: #{_lambda_.20} parent=0 // pred_fallthru
    _
  // Predicated region
  $region26: #{_lambda_.20} parent=0 // pred_check
    _
  $region27: #{_lambda_.20} parent=0 // pred_check_branch
    %114 = sbr.rel (0) target = $region29
  $region28: #{_lambda_.20} parent=0 // pred_region
    _
  $region29: #{_lambda_.20} parent=0 // pred_fallthru
    _

// kernel: _lambda_.17
$region0: #{_lambda_.17}
  #allocation0 [shape = 'u32[]', space=smem, size = 0x4, offset = 0x4, fixed_abs, tag = 'smem constant byte address 0x4 - core index']
  #allocation1 [shape = 'u32[144,128]{1,0:T(1,128)}', space=vmem, size = 0x12000, scoped, tag = 'internal scratch']
  %s0 = inlined_call_operand.vmem [shape: f32[2,8,3,4,8], index: 0, kind: input, shape index: {}]
  %s1 = inlined_call_operand.vmem [shape: bf16[2,8,8], index: 1, kind: input, shape index: {}]
  %s2 = inlined_call_operand.vmem [shape: f32[2,8,32], index: 2, kind: output, shape index: {}]
  %s3 = sld [smem:[#allocation0]]
  $region41: #{_lambda_.17} parent=0
    _
  %s5 = ssub.s32 1, %s3
  %s6 = scalar_select 0, %s5, %s3
  loop: start=0, step=1, limit=4
  $region2: #{_lambda_.17} parent=0 // loop_pre_header
    _
  $region3: #{_lambda_.17} parent=0 // loop_header
    %s8 = sphi 0, %s12
    %p9 = scmp.ge.s32.totalorder %s8, 4
    %s15 = sphi 0, %s27
    %s16 = sphi 0, %s23
    %s17 = sphi 0, %s15
    %s18 = sphi 0, %s16
    %s19 = sphi 0, %s17
    %s20 = sphi 0, %s18
    %s32 = sphi 0, %s34
    %s35 = sphi 0, %s32
    %s36 = sphi 0, %s35
    %s52 = sphi 0, %s36
    %s58 = sphi 0, %s60
    %s61 = sphi 0, %s58
    %s62 = sphi 0, %s61
    %s78 = sphi 0, %s62
    %s86 = sphi 0, %s88
    %s89 = sphi 0, %s86
    %s90 = sphi 0, %s89
    %s106 = sphi 0, %s90
  $region4: #{_lambda_.17} parent=0 // loop_header_branch
    %11 = sbr.rel (%p9) target = $region8
  $region5: #{_lambda_.17} parent=0 // loop_body
    %s13 = ssub.s32 %s8, 1
    %s14 = ssub.s32 %s8, 2
    %s21 = sadd.s32 1, %s16
    %p22 = scmp.ge.s32.totalorder %s21, 1
    %s23 = scalar_select %p22, 0, %s21
    %s24 = sadd.s32 1, %s15
    %s25 = scalar_select %p22, %s24, %s15
    %p26 = scmp.ge.s32.totalorder %s25, 2
    %s27 = scalar_select %p26, 0, %s25
    %s28 = ssub.s32 %s15, %s27
    %s29 = ssub.s32 %s16, %s23
    %s30 = sor.u32 %s28, %s29
    %p31 = scmp.eq.s32.totalorder %s30, 0
    %s33 = sadd.s32 %s32, 1
    %s34 = scalar_select %p31, %s32, %s33
    %p37 = pneg %p31
    %p38 = scmp.eq.s32.totalorder %s8, 1
    %p39 = por %p37, %p38
    %p40 = scmp.ne.s32.totalorder %s32, %s35
    %p41 = scmp.eq.s32.totalorder %s8, 0
    %p42 = por %p40, %p41
    %p43 = scmp.ne.s32.totalorder %s32, %s35
    %p44 = scmp.eq.s32.totalorder %s13, 1
    %p45 = por %p43, %p44
    %p46 = scmp.ne.s32.totalorder %s35, %s36
    %p47 = scmp.eq.s32.totalorder %s13, 0
    %p48 = por %p46, %p47
    %p49 = scmp.ne.s32.totalorder %s35, %s36
    %p50 = scmp.eq.s32.totalorder %s14, 1
    %p51 = por %p49, %p50
    %p53 = scmp.ne.s32.totalorder %s36, %s52
    %p54 = scmp.eq.s32.totalorder %s14, 0
    %p55 = por %p53, %p54
    %s56 = ssub.s32 %s15, %s27
    %p57 = scmp.eq.s32.totalorder %s56, 0
    %s59 = sadd.s32 %s58, 1
    %s60 = scalar_select %p57, %s58, %s59
    %p63 = pneg %p57
    %p64 = scmp.eq.s32.totalorder %s8, 1
    %p65 = por %p63, %p64
    %p66 = scmp.ne.s32.totalorder %s58, %s61
    %p67 = scmp.eq.s32.totalorder %s8, 0
    %p68 = por %p66, %p67
    %p69 = scmp.ne.s32.totalorder %s58, %s61
    %p70 = scmp.eq.s32.totalorder %s13, 1
    %p71 = por %p69, %p70
    %p72 = scmp.ne.s32.totalorder %s61, %s62
    %p73 = scmp.eq.s32.totalorder %s13, 0
    %p74 = por %p72, %p73
    %p75 = scmp.ne.s32.totalorder %s61, %s62
    %p76 = scmp.eq.s32.totalorder %s14, 1
    %p77 = por %p75, %p76
    %p79 = scmp.ne.s32.totalorder %s62, %s78
    %p80 = scmp.eq.s32.totalorder %s14, 0
    %p81 = por %p79, %p80
    %s82 = ssub.s32 %s15, %s27
    %s83 = ssub.s32 %s16, %s23
    %s84 = sor.u32 %s82, %s83
    %p85 = scmp.eq.s32.totalorder %s84, 0
    %s87 = sadd.s32 %s86, 1
    %s88 = scalar_select %p85, %s86, %s87
    %p91 = pneg %p85
    %p92 = scmp.eq.s32.totalorder %s8, 1
    %p93 = por %p91, %p92
    %p94 = scmp.ne.s32.totalorder %s86, %s89
    %p95 = scmp.eq.s32.totalorder %s8, 0
    %p96 = por %p94, %p95
    %p97 = scmp.ne.s32.totalorder %s86, %s89
    %p98 = scmp.eq.s32.totalorder %s13, 1
    %p99 = por %p97, %p98
    %p100 = scmp.ne.s32.totalorder %s89, %s90
    %p101 = scmp.eq.s32.totalorder %s13, 0
    %p102 = por %p100, %p101
    %p103 = scmp.ne.s32.totalorder %s89, %s90
    %p104 = scmp.eq.s32.totalorder %s14, 1
    %p105 = por %p103, %p104
    %p107 = scmp.ne.s32.totalorder %s90, %s106
    %p108 = scmp.eq.s32.totalorder %s14, 0
    %p109 = por %p107, %p108
    %p110 = scmp.le.s32.totalorder 1, %s8
    %p111 = scmp.lt.s32.totalorder %s8, 3
    %p112 = pnand %p110, %p111
    %p113 = pneg %p112
    // Predicated region
    $region9: #{_lambda_.17} parent=5 // pred_check
      _
    $region10: #{_lambda_.17} parent=5 // pred_check_branch
      %115 = sbr.rel (%p112) target = $region12
    $region11: #{_lambda_.17} parent=5 // pred_region
      %s116 = ssub.s32 %s8, 1
    $region12: #{_lambda_.17} parent=5 // pred_fallthru
      _
    %p117 = scmp.lt.s32.totalorder %s8, 2
    // Predicated region
    $region13: #{_lambda_.17} parent=5 // pred_check
      %p118 = pneg %p117
    $region14: #{_lambda_.17} parent=5 // pred_check_branch
      %120 = sbr.rel (%p118) target = $region16
    $region15: #{_lambda_.17} parent=5 // pred_region
      // Predicated region
      $region17: #{_lambda_.17} parent=15 // pred_check
        %p121 = pneg %p42
      $region18: #{_lambda_.17} parent=15 // pred_check_branch
        %123 = sbr.rel (%p121) target = $region20
      $region19: #{_lambda_.17} parent=15 // pred_region
        %p124 = scmp.lt.s32.totalorder %s15, 1
        %s125 = scalar_select %p124, %s15, 1
        %p126 = scmp.lt.s32.totalorder %s16, 0
        %s127 = scalar_select %p126, %s16, 0
        %s128 = smul.addr %s125, 24
        %s129 = sadd.s32 %s127, %s128
        %s130 = smul.addr %s129, 4
        %s131 = scalar_lea.vmem %s0, %s130
      $region20: #{_lambda_.17} parent=15 // pred_fallthru
        _
      // Predicated region
      $region21: #{_lambda_.17} parent=15 // pred_check
        %p132 = pneg %p68
      $region22: #{_lambda_.17} parent=15 // pred_check_branch
        %134 = sbr.rel (%p132) target = $region24
      $region23: #{_lambda_.17} parent=15 // pred_region
        %p135 = scmp.lt.s32.totalorder %s15, 1
        %s136 = scalar_select %p135, %s15, 1
        %s137 = smul.addr %s136, 4
        %s138 = scalar_lea.vmem %s1, %s137
      $region24: #{_lambda_.17} parent=15 // pred_fallthru
        _
    $region16: #{_lambda_.17} parent=5 // pred_fallthru
      _
    %p139 = scmp.le.s32.totalorder 1, %s8
    %p140 = scmp.lt.s32.totalorder %s8, 3
    %p141 = pnand %p139, %p140
    %p142 = pneg %p141
    // Predicated region
    $region25: #{_lambda_.17} parent=5 // pred_check
      _
    $region26: #{_lambda_.17} parent=5 // pred_check_branch
      %144 = sbr.rel (%p141) target = $region28
    $region27: #{_lambda_.17} parent=5 // pred_region
      %s145 = ssub.s32 %s8, 1
      %p146 = scmp.lt.s32.totalorder %s17, 1
      %s147 = scalar_select %p146, %s17, 1
      %p148 = scmp.lt.s32.totalorder %s18, 0
      %s149 = scalar_select %p148, %s18, 0
      %s150 = smul.addr %s147, 24
      %s151 = sadd.s32 %s149, %s150
      %s152 = smul.addr %s151, 4
      %s153 = scalar_lea.vmem %s0, %s152
      %p154 = pneg %p48
      %p155 = pneg %p45
      %p156 = scmp.lt.s32.totalorder %s17, 1
      %s157 = scalar_select %p156, %s17, 1
      %s158 = smul.addr %s157, 4
      %s159 = scalar_lea.vmem %s1, %s158
      %p160 = pneg %p74
      %p161 = pneg %p71
      %p162 = pneg %p102
      %p163 = pneg %p99
      %p164 = scmp.lt.s32.totalorder %s17, 1
      %s165 = scalar_select %p164, %s17, 1
      %p166 = scmp.lt.s32.totalorder %s18, 0
      %s167 = scalar_select %p166, %s18, 0
      %s168 = sadd.s32 %s167, %s165
      %s169 = smul.addr %s168, 8
      %s170 = scalar_lea.vmem %s2, %s169
      %p171 = scmp.lt.s32.totalorder %s17, 1
      %s172 = scalar_select %p171, %s17, 1
      %p173 = scmp.lt.s32.totalorder %s18, 0
      %s174 = scalar_select %p173, %s18, 0
      %s175 = smul.addr %s172, 24
      %s176 = sadd.s32 %s174, %s175
      %s177 = smul.addr %s176, 4
      %s178 = scalar_lea.vmem %s0, %s177
      %p179 = scmp.lt.s32.totalorder %s17, 1
      %s180 = scalar_select %p179, %s17, 1
      %s181 = smul.addr %s180, 4
      %s182 = scalar_lea.vmem %s1, %s181
      %p183 = scmp.lt.s32.totalorder %s17, 1
      %s184 = scalar_select %p183, %s17, 1
      %p185 = scmp.lt.s32.totalorder %s18, 0
      %s186 = scalar_select %p185, %s18, 0
      %s187 = sadd.s32 %s186, %s184
      %s188 = smul.addr %s187, 8
      %s189 = scalar_lea.vmem %s2, %s188
      %v191 = vld [vmem:[%s182] sm:$0xf]
      %v192 = vunpack.c.l.bf16 %v191
      %v193 = vld [vmem:[%s178] sm:$0x1]
      %v194 = vld [vmem:[%s178 + $0xc] sm:$0x1]
      %v195 = vld [vmem:[%s178 + $0x18] sm:$0x1]
      %v196 = vld [vmem:[%s178 + $0x24] sm:$0x1]
      %v197 = vld [vmem:[%s178 + $0x30] sm:$0x1]
      %v198 = vld [vmem:[%s178 + $0x3c] sm:$0x1]
      %v199 = vld [vmem:[%s178 + $0x48] sm:$0x1]
      %v200 = vld [vmem:[%s178 + $0x54] sm:$0x1]
      %s201 = scalar_lea.vmem %s178, 4
      %v202 = vld [vmem:[%s201] sm:$0x1]
      %v203 = vld [vmem:[%s201 + $0xc] sm:$0x1]
      %v204 = vld [vmem:[%s201 + $0x18] sm:$0x1]
      %v205 = vld [vmem:[%s201 + $0x24] sm:$0x1]
      %v206 = vld [vmem:[%s201 + $0x30] sm:$0x1]
      %v207 = vld [vmem:[%s201 + $0x3c] sm:$0x1]
      %v208 = vld [vmem:[%s201 + $0x48] sm:$0x1]
      %v209 = vld [vmem:[%s201 + $0x54] sm:$0x1]
      %s210 = scalar_lea.vmem %s178, 8
      %v211 = vld [vmem:[%s210] sm:$0x1]
      %v212 = vld [vmem:[%s210 + $0xc] sm:$0x1]
      %v213 = vld [vmem:[%s210 + $0x18] sm:$0x1]
      %v214 = vld [vmem:[%s210 + $0x24] sm:$0x1]
      %v215 = vld [vmem:[%s210 + $0x30] sm:$0x1]
      %v216 = vld [vmem:[%s210 + $0x3c] sm:$0x1]
      %v217 = vld [vmem:[%s210 + $0x48] sm:$0x1]
      %v218 = vld [vmem:[%s210 + $0x54] sm:$0x1]
      %v219 = vpack.c.bf16 %v193, %v193
      %v220 = vpack.c.bf16 %v194, %v194
      %v221 = vpack.c.bf16 %v195, %v195
      %v222 = vpack.c.bf16 %v196, %v196
      %v223 = vpack.c.bf16 %v197, %v197
      %v224 = vpack.c.bf16 %v198, %v198
      %v225 = vpack.c.bf16 %v199, %v199
      %v226 = vpack.c.bf16 %v200, %v200
      %v227 = vpack.c.bf16 %v202, %v202
      %v228 = vpack.c.bf16 %v203, %v203
      %v229 = vpack.c.bf16 %v204, %v204
      %v230 = vpack.c.bf16 %v205, %v205
      %v231 = vpack.c.bf16 %v206, %v206
      %v232 = vpack.c.bf16 %v207, %v207
      %v233 = vpack.c.bf16 %v208, %v208
      %v234 = vpack.c.bf16 %v209, %v209
      %v235 = vpack.c.bf16 %v211, %v211
      %v236 = vpack.c.bf16 %v212, %v212
      %v237 = vpack.c.bf16 %v213, %v213
      %v238 = vpack.c.bf16 %v214, %v214
      %v239 = vpack.c.bf16 %v215, %v215
      %v240 = vpack.c.bf16 %v216, %v216
      %v241 = vpack.c.bf16 %v217, %v217
      %v242 = vpack.c.bf16 %v218, %v218
      %v251 = vunpack.c.l.b16 %v219
      %v252 = vunpack.c.l.b16 %v220
      %v253 = vunpack.c.l.b16 %v221
      %v254 = vunpack.c.l.b16 %v222
      %v255 = vunpack.c.l.b16 %v223
      %v256 = vunpack.c.l.b16 %v224
      %v257 = vunpack.c.l.b16 %v225
      %v258 = vunpack.c.l.b16 %v226
      %v259 = vrot.slane %v252, 7
      %vm260 = vcmask 1041409
      %v261 = vsel %vm260, %v259, %v251
      %v262 = vrot.slane %v253, 6
      %vm263 = vcmask 1042434
      %v264 = vsel %vm263, %v262, %v261
      %v265 = vrot.slane %v254, 5
      %vm266 = vcmask 1043459
      %v267 = vsel %vm266, %v265, %v264
      %v268 = vrot.slane %v255, 4
      %vm269 = vcmask 1044484
      %v270 = vsel %vm269, %v268, %v267
      %v271 = vrot.slane %v256, 3
      %vm272 = vcmask 1045509
      %v273 = vsel %vm272, %v271, %v270
      %v274 = vrot.slane %v257, 2
      %vm275 = vcmask 1046534
      %v276 = vsel %vm275, %v274, %v273
      %v277 = vrot.slane %v258, 1
      %vm278 = vcmask 1047559
      %v279 = vsel %vm278, %v277, %v276
      %v280 = vpack.c.b16 %v279, %v279
      %v289 = vunpack.c.l.b16 %v227
      %v290 = vunpack.c.l.b16 %v228
      %v291 = vunpack.c.l.b16 %v229
      %v292 = vunpack.c.l.b16 %v230
      %v293 = vunpack.c.l.b16 %v231
      %v294 = vunpack.c.l.b16 %v232
      %v295 = vunpack.c.l.b16 %v233
      %v296 = vunpack.c.l.b16 %v234
      %v297 = vrot.slane %v290, 7
      %v298 = vsel %vm260, %v297, %v289
      %v299 = vrot.slane %v291, 6
      %v300 = vsel %vm263, %v299, %v298
      %v301 = vrot.slane %v292, 5
      %v302 = vsel %vm266, %v301, %v300
      %v303 = vrot.slane %v293, 4
      %v304 = vsel %vm269, %v303, %v302
      %v305 = vrot.slane %v294, 3
      %v306 = vsel %vm272, %v305, %v304
      %v307 = vrot.slane %v295, 2
      %v308 = vsel %vm275, %v307, %v306
      %v309 = vrot.slane %v296, 1
      %v310 = vsel %vm278, %v309, %v308
      %v311 = vpack.c.b16 %v310, %v310
      %vm312 = vcmask 64512
      %v314 = vsel %vm312, %v280, 0
      %v317 = vsel %vm312, %v311, 0
      %319 = vmatprep.subr.bf16.mxu0 0
      %320 = vmatpush1.bf16.xpose.msra.mxu0 %v317
      %321 = vmatprep.subr.bf16.mxu0 0
      %322 = vmatpush1.bf16.xpose.msra.mxu0 0
      %323 = vmatprep.subr.bf16.mxu0 0
      %324 = vmatpush1.bf16.xpose.msra.mxu0 0
      %325 = vmatprep.subr.bf16.mxu0 0
      %326 = vmatpush1.bf16.xpose.msra.mxu0 0
      %327 = vmatprep.subr.bf16.mxu0 0
      %328 = vmatpush1.bf16.xpose.msra.mxu0 0
      %329 = vmatprep.subr.bf16.mxu0 0
      %330 = vmatpush1.bf16.xpose.msra.mxu0 0
      %331 = vmatprep.subr.bf16.mxu0 0
      %332 = vmatpush1.bf16.xpose.msra.mxu0 0
      %333 = vmatprep.subr.bf16.mxu0 0
      %334 = vmatpush1.bf16.xpose.msra.mxu0 0
      %335 = vmatprep.subr.bf16.mxu0 0
      %336 = vmatpush1.bf16.xpose.msra.mxu0 0
      %337 = vmatprep.subr.bf16.mxu0 0
      %338 = vmatpush1.bf16.xpose.msra.mxu0 0
      %339 = vmatprep.subr.bf16.mxu0 0
      %340 = vmatpush1.bf16.xpose.msra.mxu0 0
      %341 = vmatprep.subr.bf16.mxu0 0
      %342 = vmatpush1.bf16.xpose.msra.mxu0 0
      %343 = vmatprep.subr.bf16.mxu0 0
      %344 = vmatpush1.bf16.xpose.msra.mxu0 0
      %345 = vmatprep.subr.bf16.mxu0 0
      %346 = vmatpush1.bf16.xpose.msra.mxu0 0
      %347 = vmatprep.subr.bf16.mxu0 0
      %348 = vmatpush1.bf16.xpose.msra.mxu0 0
      %349 = vmatprep.subr.bf16.mxu0 0
      %350 = vmatpush1.bf16.xpose.msra.mxu0 0
      %351 = vmatprep.mubr.bf16.mxu0 0
      %352 = vmatmul.mubr.bf16.gmra.mrb[0].mxu0 %v314
      %v353 = vpop.f32.mrb[0].mxu0
      %v354 = vadd.f32 %v192, %v353
      %v355 = vpop.f32.mrb[0].mxu0
      %v356 = vpop.f32.mrb[0].mxu0
      %v357 = vpop.f32.mrb[0].mxu0
      %358 = vdwg.mxu0
      %v359 = vsel %vm312, %v354, -inf
      %360 = vmax.xlane.f32.xlu0 %v359
      %v361 = vpop.xlane.xlu0 %360
      %v362 = vsub.f32 %v354, %v361
      %v363 = vmul.f32 %v362, 1.442695
      %v364 = vpow.pop %v363
      %v365 = vsel %vm312, %v364, 0.0
      %366 = vadd.xlane.f32.xlu0 %v365
      %v367 = vpop.xlane.xlu0 %366
      %v368 = vrcp.pop %v367
      %v369 = vmul.f32 %v364, %v368
      %v370 = vpack.c.bf16 %v369, %v369
      %v379 = vunpack.c.l.b16 %v235
      %v380 = vunpack.c.l.b16 %v236
      %v381 = vunpack.c.l.b16 %v237
      %v382 = vunpack.c.l.b16 %v238
      %v383 = vunpack.c.l.b16 %v239
      %v384 = vunpack.c.l.b16 %v240
      %v385 = vunpack.c.l.b16 %v241
      %v386 = vunpack.c.l.b16 %v242
      %v387 = vrot.slane %v380, 7
      %v388 = vsel %vm260, %v387, %v379
      %v389 = vrot.slane %v381, 6
      %v390 = vsel %vm263, %v389, %v388
      %v391 = vrot.slane %v382, 5
      %v392 = vsel %vm266, %v391, %v390
      %v393 = vrot.slane %v383, 4
      %v394 = vsel %vm269, %v393, %v392
      %v395 = vrot.slane %v384, 3
      %v396 = vsel %vm272, %v395, %v394
      %v397 = vrot.slane %v385, 2
      %v398 = vsel %vm275, %v397, %v396
      %v399 = vrot.slane %v386, 1
      %v400 = vsel %vm278, %v399, %v398
      %v401 = vpack.c.b16 %v400, %v400
      %v403 = vsel %vm312, %v370, 0
      %vm405 = vcmask 1043456
      %v407 = vsel %vm405, %v401, 0
      %409 = vmatprep.subr.bf16.mxu0 0
      %410 = vmatpush1.bf16.msra.mxu0 %v407
      %411 = vmatprep.subr.bf16.mxu0 0
      %412 = vmatpush1.bf16.msra.mxu0 0
      %413 = vmatprep.subr.bf16.mxu0 0
      %414 = vmatpush1.bf16.msra.mxu0 0
      %415 = vmatprep.subr.bf16.mxu0 0
      %416 = vmatpush1.bf16.msra.mxu0 0
      %417 = vmatprep.subr.bf16.mxu0 0
      %418 = vmatpush1.bf16.msra.mxu0 0
      %419 = vmatprep.subr.bf16.mxu0 0
      %420 = vmatpush1.bf16.msra.mxu0 0
      %421 = vmatprep.subr.bf16.mxu0 0
      %422 = vmatpush1.bf16.msra.mxu0 0
      %423 = vmatprep.subr.bf16.mxu0 0
      %424 = vmatpush1.bf16.msra.mxu0 0
      %425 = vmatprep.subr.bf16.mxu0 0
      %426 = vmatpush1.bf16.msra.mxu0 0
      %427 = vmatprep.subr.bf16.mxu0 0
      %428 = vmatpush1.bf16.msra.mxu0 0
      %429 = vmatprep.subr.bf16.mxu0 0
      %430 = vmatpush1.bf16.msra.mxu0 0
      %431 = vmatprep.subr.bf16.mxu0 0
      %432 = vmatpush1.bf16.msra.mxu0 0
      %433 = vmatprep.subr.bf16.mxu0 0
      %434 = vmatpush1.bf16.msra.mxu0 0
      %435 = vmatprep.subr.bf16.mxu0 0
      %436 = vmatpush1.bf16.msra.mxu0 0
      %437 = vmatprep.subr.bf16.mxu0 0
      %438 = vmatpush1.bf16.msra.mxu0 0
      %439 = vmatprep.subr.bf16.mxu0 0
      %440 = vmatpush1.bf16.msra.mxu0 0
      %441 = vmatprep.mubr.bf16.mxu0 0
      %442 = vmatmul.mubr.bf16.gmra.mrb[0].mxu0 %v403
      %v443 = vpop.f32.mrb[0].mxu0
      %v444 = vadd.f32 0.0, %v443
      %v445 = vpop.f32.mrb[0].mxu0
      %v446 = vpop.f32.mrb[0].mxu0
      %v447 = vpop.f32.mrb[0].mxu0
      %448 = vdwg.mxu0
      %449 = vst.msk [vmem:[%s189] sm:$0xff] %vm312, %v444
      %v450 = vld [vmem:[%s178 + $0x1] sm:$0x1]
      %v451 = vld [vmem:[%s178 + $0xd] sm:$0x1]
      %v452 = vld [vmem:[%s178 + $0x19] sm:$0x1]
      %v453 = vld [vmem:[%s178 + $0x25] sm:$0x1]
      %v454 = vld [vmem:[%s178 + $0x31] sm:$0x1]
      %v455 = vld [vmem:[%s178 + $0x3d] sm:$0x1]
      %v456 = vld [vmem:[%s178 + $0x49] sm:$0x1]
      %v457 = vld [vmem:[%s178 + $0x55] sm:$0x1]
      %v458 = vld [vmem:[%s201 + $0x1] sm:$0x1]
      %v459 = vld [vmem:[%s201 + $0xd] sm:$0x1]
      %v460 = vld [vmem:[%s201 + $0x19] sm:$0x1]
      %v461 = vld [vmem:[%s201 + $0x25] sm:$0x1]
      %v462 = vld [vmem:[%s201 + $0x31] sm:$0x1]
      %v463 = vld [vmem:[%s201 + $0x3d] sm:$0x1]
      %v464 = vld [vmem:[%s201 + $0x49] sm:$0x1]
      %v465 = vld [vmem:[%s201 + $0x55] sm:$0x1]
      %v466 = vld [vmem:[%s210 + $0x1] sm:$0x1]
      %v467 = vld [vmem:[%s210 + $0xd] sm:$0x1]
      %v468 = vld [vmem:[%s210 + $0x19] sm:$0x1]
      %v469 = vld [vmem:[%s210 + $0x25] sm:$0x1]
      %v470 = vld [vmem:[%s210 + $0x31] sm:$0x1]
      %v471 = vld [vmem:[%s210 + $0x3d] sm:$0x1]
      %v472 = vld [vmem:[%s210 + $0x49] sm:$0x1]
      %v473 = vld [vmem:[%s210 + $0x55] sm:$0x1]
      %v474 = vpack.c.bf16 %v450, %v450
      %v475 = vpack.c.bf16 %v451, %v451
      %v476 = vpack.c.bf16 %v452, %v452
      %v477 = vpack.c.bf16 %v453, %v453
      %v478 = vpack.c.bf16 %v454, %v454
      %v479 = vpack.c.bf16 %v455, %v455
      %v480 = vpack.c.bf16 %v456, %v456
      %v481 = vpack.c.bf16 %v457, %v457
      %v482 = vpack.c.bf16 %v458, %v458
      %v483 = vpack.c.bf16 %v459, %v459
      %v484 = vpack.c.bf16 %v460, %v460
      %v485 = vpack.c.bf16 %v461, %v461
      %v486 = vpack.c.bf16 %v462, %v462
      %v487 = vpack.c.bf16 %v463, %v463
      %v488 = vpack.c.bf16 %v464, %v464
      %v489 = vpack.c.bf16 %v465, %v465
      %v490 = vpack.c.bf16 %v466, %v466
      %v491 = vpack.c.bf16 %v467, %v467
      %v492 = vpack.c.bf16 %v468, %v468
      %v493 = vpack.c.bf16 %v469, %v469
      %v494 = vpack.c.bf16 %v470, %v470
      %v495 = vpack.c.bf16 %v471, %v471
      %v496 = vpack.c.bf16 %v472, %v472
      %v497 = vpack.c.bf16 %v473, %v473
      %v506 = vunpack.c.l.b16 %v474
      %v507 = vunpack.c.l.b16 %v475
      %v508 = vunpack.c.l.b16 %v476
      %v509 = vunpack.c.l.b16 %v477
      %v510 = vunpack.c.l.b16 %v478
      %v511 = vunpack.c.l.b16 %v479
      %v512 = vunpack.c.l.b16 %v480
      %v513 = vunpack.c.l.b16 %v481
      %v514 = vrot.slane %v507, 7
      %v515 = vsel %vm260, %v514, %v506
      %v516 = vrot.slane %v508, 6
      %v517 = vsel %vm263, %v516, %v515
      %v518 = vrot.slane %v509, 5
      %v519 = vsel %vm266, %v518, %v517
      %v520 = vrot.slane %v510, 4
      %v521 = vsel %vm269, %v520, %v519
      %v522 = vrot.slane %v511, 3
      %v523 = vsel %vm272, %v522, %v521
      %v524 = vrot.slane %v512, 2
      %v525 = vsel %vm275, %v524, %v523
      %v526 = vrot.slane %v513, 1
      %v527 = vsel %vm278, %v526, %v525
      %v528 = vpack.c.b16 %v527, %v527
      %v537 = vunpack.c.l.b16 %v482
      %v538 = vunpack.c.l.b16 %v483
      %v539 = vunpack.c.l.b16 %v484
      %v540 = vunpack.c.l.b16 %v485
      %v541 = vunpack.c.l.b16 %v486
      %v542 = vunpack.c.l.b16 %v487
      %v543 = vunpack.c.l.b16 %v488
      %v544 = vunpack.c.l.b16 %v489
      %v545 = vrot.slane %v538, 7
      %v546 = vsel %vm260, %v545, %v537
      %v547 = vrot.slane %v539, 6
      %v548 = vsel %vm263, %v547, %v546
      %v549 = vrot.slane %v540, 5
      %v550 = vsel %vm266, %v549, %v548
      %v551 = vrot.slane %v541, 4
      %v552 = vsel %vm269, %v551, %v550
      %v553 = vrot.slane %v542, 3
      %v554 = vsel %vm272, %v553, %v552
      %v555 = vrot.slane %v543, 2
      %v556 = vsel %vm275, %v555, %v554
      %v557 = vrot.slane %v544, 1
      %v558 = vsel %vm278, %v557, %v556
      %v559 = vpack.c.b16 %v558, %v558
      %v561 = vsel %vm312, %v528, 0
      %v564 = vsel %vm312, %v559, 0
      %566 = vmatprep.subr.bf16.mxu0 0
      %567 = vmatpush1.bf16.xpose.msra.mxu0 %v564
      %568 = vmatprep.subr.bf16.mxu0 0
      %569 = vmatpush1.bf16.xpose.msra.mxu0 0
      %570 = vmatprep.subr.bf16.mxu0 0
      %571 = vmatpush1.bf16.xpose.msra.mxu0 0
      %572 = vmatprep.subr.bf16.mxu0 0
      %573 = vmatpush1.bf16.xpose.msra.mxu0 0
      %574 = vmatprep.subr.bf16.mxu0 0
      %575 = vmatpush1.bf16.xpose.msra.mxu0 0
      %576 = vmatprep.subr.bf16.mxu0 0
      %577 = vmatpush1.bf16.xpose.msra.mxu0 0
      %578 = vmatprep.subr.bf16.mxu0 0
      %579 = vmatpush1.bf16.xpose.msra.mxu0 0
      %580 = vmatprep.subr.bf16.mxu0 0
      %581 = vmatpush1.bf16.xpose.msra.mxu0 0
      %582 = vmatprep.subr.bf16.mxu0 0
      %583 = vmatpush1.bf16.xpose.msra.mxu0 0
      %584 = vmatprep.subr.bf16.mxu0 0
      %585 = vmatpush1.bf16.xpose.msra.mxu0 0
      %586 = vmatprep.subr.bf16.mxu0 0
      %587 = vmatpush1.bf16.xpose.msra.mxu0 0
      %588 = vmatprep.subr.bf16.mxu0 0
      %589 = vmatpush1.bf16.xpose.msra.mxu0 0
      %590 = vmatprep.subr.bf16.mxu0 0
      %591 = vmatpush1.bf16.xpose.msra.mxu0 0
      %592 = vmatprep.subr.bf16.mxu0 0
      %593 = vmatpush1.bf16.xpose.msra.mxu0 0
      %594 = vmatprep.subr.bf16.mxu0 0
      %595 = vmatpush1.bf16.xpose.msra.mxu0 0
      %596 = vmatprep.subr.bf16.mxu0 0
      %597 = vmatpush1.bf16.xpose.msra.mxu0 0
      %598 = vmatprep.mubr.bf16.mxu0 0
      %599 = vmatmul.mubr.bf16.gmra.mrb[0].mxu0 %v561
      %v600 = vpop.f32.mrb[0].mxu0
      %v601 = vadd.f32 %v192, %v600
      %v602 = vpop.f32.mrb[0].mxu0
      %v603 = vpop.f32.mrb[0].mxu0
      %v604 = vpop.f32.mrb[0].mxu0
      %605 = vdwg.mxu0
      %v606 = vsel %vm312, %v601, -inf
      %607 = vmax.xlane.f32.xlu0 %v606
      %v608 = vpop.xlane.xlu0 %607
      %v609 = vsub.f32 %v601, %v608
      %v610 = vmul.f32 %v609, 1.442695
      %v611 = vpow.pop %v610
      %v612 = vsel %vm312, %v611, 0.0
      %613 = vadd.xlane.f32.xlu0 %v612
      %v614 = vpop.xlane.xlu0 %613
      %v615 = vrcp.pop %v614
      %v616 = vmul.f32 %v611, %v615
      %v617 = vpack.c.bf16 %v616, %v616
      %v626 = vunpack.c.l.b16 %v490
      %v627 = vunpack.c.l.b16 %v491
      %v628 = vunpack.c.l.b16 %v492
      %v629 = vunpack.c.l.b16 %v493
      %v630 = vunpack.c.l.b16 %v494
      %v631 = vunpack.c.l.b16 %v495
      %v632 = vunpack.c.l.b16 %v496
      %v633 = vunpack.c.l.b16 %v497
      %v634 = vrot.slane %v627, 7
      %v635 = vsel %vm260, %v634, %v626
      %v636 = vrot.slane %v628, 6
      %v637 = vsel %vm263, %v636, %v635
      %v638 = vrot.slane %v629, 5
      %v639 = vsel %vm266, %v638, %v637
      %v640 = vrot.slane %v630, 4
      %v641 = vsel %vm269, %v640, %v639
      %v642 = vrot.slane %v631, 3
      %v643 = vsel %vm272, %v642, %v641
      %v644 = vrot.slane %v632, 2
      %v645 = vsel %vm275, %v644, %v643
      %v646 = vrot.slane %v633, 1
      %v647 = vsel %vm278, %v646, %v645
      %v648 = vpack.c.b16 %v647, %v647
      %v650 = vsel %vm312, %v617, 0
      %v653 = vsel %vm405, %v648, 0
      %655 = vmatprep.subr.bf16.mxu0 0
      %656 = vmatpush1.bf16.msra.mxu0 %v653
      %657 = vmatprep.subr.bf16.mxu0 0
      %658 = vmatpush1.bf16.msra.mxu0 0
      %659 = vmatprep.subr.bf16.mxu0 0
      %660 = vmatpush1.bf16.msra.mxu0 0
      %661 = vmatprep.subr.bf16.mxu0 0
      %662 = vmatpush1.bf16.msra.mxu0 0
      %663 = vmatprep.subr.bf16.mxu0 0
      %664 = vmatpush1.bf16.msra.mxu0 0
      %665 = vmatprep.subr.bf16.mxu0 0
      %666 = vmatpush1.bf16.msra.mxu0 0
      %667 = vmatprep.subr.bf16.mxu0 0
      %668 = vmatpush1.bf16.msra.mxu0 0
      %669 = vmatprep.subr.bf16.mxu0 0
      %670 = vmatpush1.bf16.msra.mxu0 0
      %671 = vmatprep.subr.bf16.mxu0 0
      %672 = vmatpush1.bf16.msra.mxu0 0
      %673 = vmatprep.subr.bf16.mxu0 0
      %674 = vmatpush1.bf16.msra.mxu0 0
      %675 = vmatprep.subr.bf16.mxu0 0
      %676 = vmatpush1.bf16.msra.mxu0 0
      %677 = vmatprep.subr.bf16.mxu0 0
      %678 = vmatpush1.bf16.msra.mxu0 0
      %679 = vmatprep.subr.bf16.mxu0 0
      %680 = vmatpush1.bf16.msra.mxu0 0
      %681 = vmatprep.subr.bf16.mxu0 0
      %682 = vmatpush1.bf16.msra.mxu0 0
      %683 = vmatprep.subr.bf16.mxu0 0
      %684 = vmatpush1.bf16.msra.mxu0 0
      %685 = vmatprep.subr.bf16.mxu0 0
      %686 = vmatpush1.bf16.msra.mxu0 0
      %687 = vmatprep.mubr.bf16.mxu0 0
      %688 = vmatmul.mubr.bf16.gmra.mrb[0].mxu0 %v650
      %v689 = vpop.f32.mrb[0].mxu0
      %v690 = vadd.f32 0.0, %v689
      %v691 = vpop.f32.mrb[0].mxu0
      %v692 = vpop.f32.mrb[0].mxu0
      %v693 = vpop.f32.mrb[0].mxu0
      %694 = vdwg.mxu0
      %696 = vrot.lane.b32.xlu0 %v690, 8
      %v697 = vpop.permute.xlu0 %696
      %vm699 = vcmask 130112
      %700 = vst.msk [vmem:[%s189] sm:$0xff] %vm699, %v697
      %v701 = vld [vmem:[%s178 + $0x2] sm:$0x1]
      %v702 = vld [vmem:[%s178 + $0xe] sm:$0x1]
      %v703 = vld [vmem:[%s178 + $0x1a] sm:$0x1]
      %v704 = vld [vmem:[%s178 + $0x26] sm:$0x1]
      %v705 = vld [vmem:[%s178 + $0x32] sm:$0x1]
      %v706 = vld [vmem:[%s178 + $0x3e] sm:$0x1]
      %v707 = vld [vmem:[%s178 + $0x4a] sm:$0x1]
      %v708 = vld [vmem:[%s178 + $0x56] sm:$0x1]
      %v709 = vld [vmem:[%s201 + $0x2] sm:$0x1]
      %v710 = vld [vmem:[%s201 + $0xe] sm:$0x1]
      %v711 = vld [vmem:[%s201 + $0x1a] sm:$0x1]
      %v712 = vld [vmem:[%s201 + $0x26] sm:$0x1]
      %v713 = vld [vmem:[%s201 + $0x32] sm:$0x1]
      %v714 = vld [vmem:[%s201 + $0x3e] sm:$0x1]
      %v715 = vld [vmem:[%s201 + $0x4a] sm:$0x1]
      %v716 = vld [vmem:[%s201 + $0x56] sm:$0x1]
      %v717 = vld [vmem:[%s210 + $0x2] sm:$0x1]
      %v718 = vld [vmem:[%s210 + $0xe] sm:$0x1]
      %v719 = vld [vmem:[%s210 + $0x1a] sm:$0x1]
      %v720 = vld [vmem:[%s210 + $0x26] sm:$0x1]
      %v721 = vld [vmem:[%s210 + $0x32] sm:$0x1]
      %v722 = vld [vmem:[%s210 + $0x3e] sm:$0x1]
      %v723 = vld [vmem:[%s210 + $0x4a] sm:$0x1]
      %v724 = vld [vmem:[%s210 + $0x56] sm:$0x1]
      %v725 = vpack.c.bf16 %v701, %v701
      %v726 = vpack.c.bf16 %v702, %v702
      %v727 = vpack.c.bf16 %v703, %v703
      %v728 = vpack.c.bf16 %v704, %v704
      %v729 = vpack.c.bf16 %v705, %v705
      %v730 = vpack.c.bf16 %v706, %v706
      %v731 = vpack.c.bf16 %v707, %v707
      %v732 = vpack.c.bf16 %v708, %v708
      %v733 = vpack.c.bf16 %v709, %v709
      %v734 = vpack.c.bf16 %v710, %v710
      %v735 = vpack.c.bf16 %v711, %v711
      %v736 = vpack.c.bf16 %v712, %v712
      %v737 = vpack.c.bf16 %v713, %v713
      %v738 = vpack.c.bf16 %v714, %v714
      %v739 = vpack.c.bf16 %v715, %v715
      %v740 = vpack.c.bf16 %v716, %v716
      %v741 = vpack.c.bf16 %v717, %v717
      %v742 = vpack.c.bf16 %v718, %v718
      %v743 = vpack.c.bf16 %v719, %v719
      %v744 = vpack.c.bf16 %v720, %v720
      %v745 = vpack.c.bf16 %v721, %v721
      %v746 = vpack.c.bf16 %v722, %v722
      %v747 = vpack.c.bf16 %v723, %v723
      %v748 = vpack.c.bf16 %v724, %v724
      %v757 = vunpack.c.l.b16 %v725
      %v758 = vunpack.c.l.b16 %v726
      %v759 = vunpack.c.l.b16 %v727
      %v760 = vunpack.c.l.b16 %v728
      %v761 = vunpack.c.l.b16 %v729
      %v762 = vunpack.c.l.b16 %v730
      %v763 = vunpack.c.l.b16 %v731
      %v764 = vunpack.c.l.b16 %v732
      %v765 = vrot.slane %v758, 7
      %v766 = vsel %vm260, %v765, %v757
      %v767 = vrot.slane %v759, 6
      %v768 = vsel %vm263, %v767, %v766
      %v769 = vrot.slane %v760, 5
      %v770 = vsel %vm266, %v769, %v768
      %v771 = vrot.slane %v761, 4
      %v772 = vsel %vm269, %v771, %v770
      %v773 = vrot.slane %v762, 3
      %v774 = vsel %vm272, %v773, %v772
      %v775 = vrot.slane %v763, 2
      %v776 = vsel %vm275, %v775, %v774
      %v777 = vrot.slane %v764, 1
      %v778 = vsel %vm278, %v777, %v776
      %v779 = vpack.c.b16 %v778, %v778
      %v788 = vunpack.c.l.b16 %v733
      %v789 = vunpack.c.l.b16 %v734
      %v790 = vunpack.c.l.b16 %v735
      %v791 = vunpack.c.l.b16 %v736
      %v792 = vunpack.c.l.b16 %v737
      %v793 = vunpack.c.l.b16 %v738
      %v794 = vunpack.c.l.b16 %v739
      %v795 = vunpack.c.l.b16 %v740
      %v796 = vrot.slane %v789, 7
      %v797 = vsel %vm260, %v796, %v788
      %v798 = vrot.slane %v790, 6
      %v799 = vsel %vm263, %v798, %v797
      %v800 = vrot.slane %v791, 5
      %v801 = vsel %vm266, %v800, %v799
      %v802 = vrot.slane %v792, 4
      %v803 = vsel %vm269, %v802, %v801
      %v804 = vrot.slane %v793, 3
      %v805 = vsel %vm272, %v804, %v803
      %v806 = vrot.slane %v794, 2
      %v807 = vsel %vm275, %v806, %v805
      %v808 = vrot.slane %v795, 1
      %v809 = vsel %vm278, %v808, %v807
      %v810 = vpack.c.b16 %v809, %v809
      %v812 = vsel %vm312, %v779, 0
      %v815 = vsel %vm312, %v810, 0
      %817 = vmatprep.subr.bf16.mxu0 0
      %818 = vmatpush1.bf16.xpose.msra.mxu0 %v815
      %819 = vmatprep.subr.bf16.mxu0 0
      %820 = vmatpush1.bf16.xpose.msra.mxu0 0
      %821 = vmatprep.subr.bf16.mxu0 0
      %822 = vmatpush1.bf16.xpose.msra.mxu0 0
      %823 = vmatprep.subr.bf16.mxu0 0
      %824 = vmatpush1.bf16.xpose.msra.mxu0 0
      %825 = vmatprep.subr.bf16.mxu0 0
      %826 = vmatpush1.bf16.xpose.msra.mxu0 0
      %827 = vmatprep.subr.bf16.mxu0 0
      %828 = vmatpush1.bf16.xpose.msra.mxu0 0
      %829 = vmatprep.subr.bf16.mxu0 0
      %830 = vmatpush1.bf16.xpose.msra.mxu0 0
      %831 = vmatprep.subr.bf16.mxu0 0
      %832 = vmatpush1.bf16.xpose.msra.mxu0 0
      %833 = vmatprep.subr.bf16.mxu0 0
      %834 = vmatpush1.bf16.xpose.msra.mxu0 0
      %835 = vmatprep.subr.bf16.mxu0 0
      %836 = vmatpush1.bf16.xpose.msra.mxu0 0
      %837 = vmatprep.subr.bf16.mxu0 0
      %838 = vmatpush1.bf16.xpose.msra.mxu0 0
      %839 = vmatprep.subr.bf16.mxu0 0
      %840 = vmatpush1.bf16.xpose.msra.mxu0 0
      %841 = vmatprep.subr.bf16.mxu0 0
      %842 = vmatpush1.bf16.xpose.msra.mxu0 0
      %843 = vmatprep.subr.bf16.mxu0 0
      %844 = vmatpush1.bf16.xpose.msra.mxu0 0
      %845 = vmatprep.subr.bf16.mxu0 0
      %846 = vmatpush1.bf16.xpose.msra.mxu0 0
      %847 = vmatprep.subr.bf16.mxu0 0
      %848 = vmatpush1.bf16.xpose.msra.mxu0 0
      %849 = vmatprep.mubr.bf16.mxu0 0
      %850 = vmatmul.mubr.bf16.gmra.mrb[0].mxu0 %v812
      %v851 = vpop.f32.mrb[0].mxu0
      %v852 = vadd.f32 %v192, %v851
      %v853 = vpop.f32.mrb[0].mxu0
      %v854 = vpop.f32.mrb[0].mxu0
      %v855 = vpop.f32.mrb[0].mxu0
      %856 = vdwg.mxu0
      %v857 = vsel %vm312, %v852, -inf
      %858 = vmax.xlane.f32.xlu0 %v857
      %v859 = vpop.xlane.xlu0 %858
      %v860 = vsub.f32 %v852, %v859
      %v861 = vmul.f32 %v860, 1.442695
      %v862 = vpow.pop %v861
      %v863 = vsel %vm312, %v862, 0.0
      %864 = vadd.xlane.f32.xlu0 %v863
      %v865 = vpop.xlane.xlu0 %864
      %v866 = vrcp.pop %v865
      %v867 = vmul.f32 %v862, %v866
      %v868 = vpack.c.bf16 %v867, %v867
      %v877 = vunpack.c.l.b16 %v741
      %v878 = vunpack.c.l.b16 %v742
      %v879 = vunpack.c.l.b16 %v743
      %v880 = vunpack.c.l.b16 %v744
      %v881 = vunpack.c.l.b16 %v745
      %v882 = vunpack.c.l.b16 %v746
      %v883 = vunpack.c.l.b16 %v747
      %v884 = vunpack.c.l.b16 %v748
      %v885 = vrot.slane %v878, 7
      %v886 = vsel %vm260, %v885, %v877
      %v887 = vrot.slane %v879, 6
      %v888 = vsel %vm263, %v887, %v886
      %v889 = vrot.slane %v880, 5
      %v890 = vsel %vm266, %v889, %v888
      %v891 = vrot.slane %v881, 4
      %v892 = vsel %vm269, %v891, %v890
      %v893 = vrot.slane %v882, 3
      %v894 = vsel %vm272, %v893, %v892
      %v895 = vrot.slane %v883, 2
      %v896 = vsel %vm275, %v895, %v894
      %v897 = vrot.slane %v884, 1
      %v898 = vsel %vm278, %v897, %v896
      %v899 = vpack.c.b16 %v898, %v898
      %v901 = vsel %vm312, %v868, 0
      %v904 = vsel %vm405, %v899, 0
      %906 = vmatprep.subr.bf16.mxu0 0
      %907 = vmatpush1.bf16.msra.mxu0 %v904
      %908 = vmatprep.subr.bf16.mxu0 0
      %909 = vmatpush1.bf16.msra.mxu0 0
      %910 = vmatprep.subr.bf16.mxu0 0
      %911 = vmatpush1.bf16.msra.mxu0 0
      %912 = vmatprep.subr.bf16.mxu0 0
      %913 = vmatpush1.bf16.msra.mxu0 0
      %914 = vmatprep.subr.bf16.mxu0 0
      %915 = vmatpush1.bf16.msra.mxu0 0
      %916 = vmatprep.subr.bf16.mxu0 0
      %917 = vmatpush1.bf16.msra.mxu0 0
      %918 = vmatprep.subr.bf16.mxu0 0
      %919 = vmatpush1.bf16.msra.mxu0 0
      %920 = vmatprep.subr.bf16.mxu0 0
      %921 = vmatpush1.bf16.msra.mxu0 0
      %922 = vmatprep.subr.bf16.mxu0 0
      %923 = vmatpush1.bf16.msra.mxu0 0
      %924 = vmatprep.subr.bf16.mxu0 0
      %925 = vmatpush1.bf16.msra.mxu0 0
      %926 = vmatprep.subr.bf16.mxu0 0
      %927 = vmatpush1.bf16.msra.mxu0 0
      %928 = vmatprep.subr.bf16.mxu0 0
      %929 = vmatpush1.bf16.msra.mxu0 0
      %930 = vmatprep.subr.bf16.mxu0 0
      %931 = vmatpush1.bf16.msra.mxu0 0
      %932 = vmatprep.subr.bf16.mxu0 0
      %933 = vmatpush1.bf16.msra.mxu0 0
      %934 = vmatprep.subr.bf16.mxu0 0
      %935 = vmatpush1.bf16.msra.mxu0 0
      %936 = vmatprep.subr.bf16.mxu0 0
      %937 = vmatpush1.bf16.msra.mxu0 0
      %938 = vmatprep.mubr.bf16.mxu0 0
      %939 = vmatmul.mubr.bf16.gmra.mrb[0].mxu0 %v901
      %v940 = vpop.f32.mrb[0].mxu0
      %v941 = vadd.f32 0.0, %v940
      %v942 = vpop.f32.mrb[0].mxu0
      %v943 = vpop.f32.mrb[0].mxu0
      %v944 = vpop.f32.mrb[0].mxu0
      %945 = vdwg.mxu0
      %947 = vrot.lane.b32.xlu0 %v941, 16
      %v948 = vpop.permute.xlu0 %947
      %vm950 = vcmask 195712
      %951 = vst.msk [vmem:[%s189] sm:$0xff] %vm950, %v948
      %v952 = vld [vmem:[%s178 + $0x3] sm:$0x1]
      %v953 = vld [vmem:[%s178 + $0xf] sm:$0x1]
      %v954 = vld [vmem:[%s178 + $0x1b] sm:$0x1]
      %v955 = vld [vmem:[%s178 + $0x27] sm:$0x1]
      %v956 = vld [vmem:[%s178 + $0x33] sm:$0x1]
      %v957 = vld [vmem:[%s178 + $0x3f] sm:$0x1]
      %v958 = vld [vmem:[%s178 + $0x4b] sm:$0x1]
      %v959 = vld [vmem:[%s178 + $0x57] sm:$0x1]
      %v960 = vld [vmem:[%s201 + $0x3] sm:$0x1]
      %v961 = vld [vmem:[%s201 + $0xf] sm:$0x1]
      %v962 = vld [vmem:[%s201 + $0x1b] sm:$0x1]
      %v963 = vld [vmem:[%s201 + $0x27] sm:$0x1]
      %v964 = vld [vmem:[%s201 + $0x33] sm:$0x1]
      %v965 = vld [vmem:[%s201 + $0x3f] sm:$0x1]
      %v966 = vld [vmem:[%s201 + $0x4b] sm:$0x1]
      %v967 = vld [vmem:[%s201 + $0x57] sm:$0x1]
      %v968 = vld [vmem:[%s210 + $0x3] sm:$0x1]
      %v969 = vld [vmem:[%s210 + $0xf] sm:$0x1]
      %v970 = vld [vmem:[%s210 + $0x1b] sm:$0x1]
      %v971 = vld [vmem:[%s210 + $0x27] sm:$0x1]
      %v972 = vld [vmem:[%s210 + $0x33] sm:$0x1]
      %v973 = vld [vmem:[%s210 + $0x3f] sm:$0x1]
      %v974 = vld [vmem:[%s210 + $0x4b] sm:$0x1]
      %v975 = vld [vmem:[%s210 + $0x57] sm:$0x1]
      %v976 = vpack.c.bf16 %v952, %v952
      %v977 = vpack.c.bf16 %v953, %v953
      %v978 = vpack.c.bf16 %v954, %v954
      %v979 = vpack.c.bf16 %v955, %v955
      %v980 = vpack.c.bf16 %v956, %v956
      %v981 = vpack.c.bf16 %v957, %v957
      %v982 = vpack.c.bf16 %v958, %v958
      %v983 = vpack.c.bf16 %v959, %v959
      %v984 = vpack.c.bf16 %v960, %v960
      %v985 = vpack.c.bf16 %v961, %v961
      %v986 = vpack.c.bf16 %v962, %v962
      %v987 = vpack.c.bf16 %v963, %v963
      %v988 = vpack.c.bf16 %v964, %v964
      %v989 = vpack.c.bf16 %v965, %v965
      %v990 = vpack.c.bf16 %v966, %v966
      %v991 = vpack.c.bf16 %v967, %v967
      %v992 = vpack.c.bf16 %v968, %v968
      %v993 = vpack.c.bf16 %v969, %v969
      %v994 = vpack.c.bf16 %v970, %v970
      %v995 = vpack.c.bf16 %v971, %v971
      %v996 = vpack.c.bf16 %v972, %v972
      %v997 = vpack.c.bf16 %v973, %v973
      %v998 = vpack.c.bf16 %v974, %v974
      %v999 = vpack.c.bf16 %v975, %v975
      %v1008 = vunpack.c.l.b16 %v976
      %v1009 = vunpack.c.l.b16 %v977
      %v1010 = vunpack.c.l.b16 %v978
      %v1011 = vunpack.c.l.b16 %v979
      %v1012 = vunpack.c.l.b16 %v980
      %v1013 = vunpack.c.l.b16 %v981
      %v1014 = vunpack.c.l.b16 %v982
      %v1015 = vunpack.c.l.b16 %v983
      %v1016 = vrot.slane %v1009, 7
      %v1017 = vsel %vm260, %v1016, %v1008
      %v1018 = vrot.slane %v1010, 6
      %v1019 = vsel %vm263, %v1018, %v1017
      %v1020 = vrot.slane %v1011, 5
      %v1021 = vsel %vm266, %v1020, %v1019
      %v1022 = vrot.slane %v1012, 4
      %v1023 = vsel %vm269, %v1022, %v1021
      %v1024 = vrot.slane %v1013, 3
      %v1025 = vsel %vm272, %v1024, %v1023
      %v1026 = vrot.slane %v1014, 2
      %v1027 = vsel %vm275, %v1026, %v1025
      %v1028 = vrot.slane %v1015, 1
      %v1029 = vsel %vm278, %v1028, %v1027
      %v1030 = vpack.c.b16 %v1029, %v1029
      %v1039 = vunpack.c.l.b16 %v984
      %v1040 = vunpack.c.l.b16 %v985
      %v1041 = vunpack.c.l.b16 %v986
      %v1042 = vunpack.c.l.b16 %v987
      %v1043 = vunpack.c.l.b16 %v988
      %v1044 = vunpack.c.l.b16 %v989
      %v1045 = vunpack.c.l.b16 %v990
      %v1046 = vunpack.c.l.b16 %v991
      %v1047 = vrot.slane %v1040, 7
      %v1048 = vsel %vm260, %v1047, %v1039
      %v1049 = vrot.slane %v1041, 6
      %v1050 = vsel %vm263, %v1049, %v1048
      %v1051 = vrot.slane %v1042, 5
      %v1052 = vsel %vm266, %v1051, %v1050
      %v1053 = vrot.slane %v1043, 4
      %v1054 = vsel %vm269, %v1053, %v1052
      %v1055 = vrot.slane %v1044, 3
      %v1056 = vsel %vm272, %v1055, %v1054
      %v1057 = vrot.slane %v1045, 2
      %v1058 = vsel %vm275, %v1057, %v1056
      %v1059 = vrot.slane %v1046, 1
      %v1060 = vsel %vm278, %v1059, %v1058
      %v1061 = vpack.c.b16 %v1060, %v1060
      %v1063 = vsel %vm312, %v1030, 0
      %v1066 = vsel %vm312, %v1061, 0
      %1068 = vmatprep.subr.bf16.mxu0 0
      %1069 = vmatpush1.bf16.xpose.msra.mxu0 %v1066
      %1070 = vmatprep.subr.bf16.mxu0 0
      %1071 = vmatpush1.bf16.xpose.msra.mxu0 0
      %1072 = vmatprep.subr.bf16.mxu0 0
      %1073 = vmatpush1.bf16.xpose.msra.mxu0 0
      %1074 = vmatprep.subr.bf16.mxu0 0
      %1075 = vmatpush1.bf16.xpose.msra.mxu0 0
      %1076 = vmatprep.subr.bf16.mxu0 0
      %1077 = vmatpush1.bf16.xpose.msra.mxu0 0
      %1078 = vmatprep.subr.bf16.mxu0 0
      %1079 = vmatpush1.bf16.xpose.msra.mxu0 0
      %1080 = vmatprep.subr.bf16.mxu0 0
      %1081 = vmatpush1.bf16.xpose.msra.mxu0 0
      %1082 = vmatprep.subr.bf16.mxu0 0
      %1083 = vmatpush1.bf16.xpose.msra.mxu0 0
      %1084 = vmatprep.subr.bf16.mxu0 0
      %1085 = vmatpush1.bf16.xpose.msra.mxu0 0
      %1086 = vmatprep.subr.bf16.mxu0 0
      %1087 = vmatpush1.bf16.xpose.msra.mxu0 0
      %1088 = vmatprep.subr.bf16.mxu0 0
      %1089 = vmatpush1.bf16.xpose.msra.mxu0 0
      %1090 = vmatprep.subr.bf16.mxu0 0
      %1091 = vmatpush1.bf16.xpose.msra.mxu0 0
      %1092 = vmatprep.subr.bf16.mxu0 0
      %1093 = vmatpush1.bf16.xpose.msra.mxu0 0
      %1094 = vmatprep.subr.bf16.mxu0 0
      %1095 = vmatpush1.bf16.xpose.msra.mxu0 0
      %1096 = vmatprep.subr.bf16.mxu0 0
      %1097 = vmatpush1.bf16.xpose.msra.mxu0 0
      %1098 = vmatprep.subr.bf16.mxu0 0
      %1099 = vmatpush1.bf16.xpose.msra.mxu0 0
      %1100 = vmatprep.mubr.bf16.mxu0 0
      %1101 = vmatmul.mubr.bf16.gmra.mrb[0].mxu0 %v1063
      %v1102 = vpop.f32.mrb[0].mxu0
      %v1103 = vadd.f32 %v192, %v1102
      %v1104 = vpop.f32.mrb[0].mxu0
      %v1105 = vpop.f32.mrb[0].mxu0
      %v1106 = vpop.f32.mrb[0].mxu0
      %1107 = vdwg.mxu0
      %v1108 = vsel %vm312, %v1103, -inf
      %1109 = vmax.xlane.f32.xlu0 %v1108
      %v1110 = vpop.xlane.xlu0 %1109
      %v1111 = vsub.f32 %v1103, %v1110
      %v1112 = vmul.f32 %v1111, 1.442695
      %v1113 = vpow.pop %v1112
      %v1114 = vsel %vm312, %v1113, 0.0
      %1115 = vadd.xlane.f32.xlu0 %v1114
      %v1116 = vpop.xlane.xlu0 %1115
      %v1117 = vrcp.pop %v1116
      %v1118 = vmul.f32 %v1113, %v1117
      %v1119 = vpack.c.bf16 %v1118, %v1118
      %v1128 = vunpack.c.l.b16 %v992
      %v1129 = vunpack.c.l.b16 %v993
      %v1130 = vunpack.c.l.b16 %v994
      %v1131 = vunpack.c.l.b16 %v995
      %v1132 = vunpack.c.l.b16 %v996
      %v1133 = vunpack.c.l.b16 %v997
      %v1134 = vunpack.c.l.b16 %v998
      %v1135 = vunpack.c.l.b16 %v999
      %v1136 = vrot.slane %v1129, 7
      %v1137 = vsel %vm260, %v1136, %v1128
      %v1138 = vrot.slane %v1130, 6
      %v1139 = vsel %vm263, %v1138, %v1137
      %v1140 = vrot.slane %v1131, 5
      %v1141 = vsel %vm266, %v1140, %v1139
      %v1142 = vrot.slane %v1132, 4
      %v1143 = vsel %vm269, %v1142, %v1141
      %v1144 = vrot.slane %v1133, 3
      %v1145 = vsel %vm272, %v1144, %v1143
      %v1146 = vrot.slane %v1134, 2
      %v1147 = vsel %vm275, %v1146, %v1145
      %v1148 = vrot.slane %v1135, 1
      %v1149 = vsel %vm278, %v1148, %v1147
      %v1150 = vpack.c.b16 %v1149, %v1149
      %v1152 = vsel %vm312, %v1119, 0
      %v1155 = vsel %vm405, %v1150, 0
      %1157 = vmatprep.subr.bf16.mxu0 0
      %1158 = vmatpush1.bf16.msra.mxu0 %v1155
      %1159 = vmatprep.subr.bf16.mxu0 0
      %1160 = vmatpush1.bf16.msra.mxu0 0
      %1161 = vmatprep.subr.bf16.mxu0 0
      %1162 = vmatpush1.bf16.msra.mxu0 0
      %1163 = vmatprep.subr.bf16.mxu0 0
      %1164 = vmatpush1.bf16.msra.mxu0 0
      %1165 = vmatprep.subr.bf16.mxu0 0
      %1166 = vmatpush1.bf16.msra.mxu0 0
      %1167 = vmatprep.subr.bf16.mxu0 0
      %1168 = vmatpush1.bf16.msra.mxu0 0
      %1169 = vmatprep.subr.bf16.mxu0 0
      %1170 = vmatpush1.bf16.msra.mxu0 0
      %1171 = vmatprep.subr.bf16.mxu0 0
      %1172 = vmatpush1.bf16.msra.mxu0 0
      %1173 = vmatprep.subr.bf16.mxu0 0
      %1174 = vmatpush1.bf16.msra.mxu0 0
      %1175 = vmatprep.subr.bf16.mxu0 0
      %1176 = vmatpush1.bf16.msra.mxu0 0
      %1177 = vmatprep.subr.bf16.mxu0 0
      %1178 = vmatpush1.bf16.msra.mxu0 0
      %1179 = vmatprep.subr.bf16.mxu0 0
      %1180 = vmatpush1.bf16.msra.mxu0 0
      %1181 = vmatprep.subr.bf16.mxu0 0
      %1182 = vmatpush1.bf16.msra.mxu0 0
      %1183 = vmatprep.subr.bf16.mxu0 0
      %1184 = vmatpush1.bf16.msra.mxu0 0
      %1185 = vmatprep.subr.bf16.mxu0 0
      %1186 = vmatpush1.bf16.msra.mxu0 0
      %1187 = vmatprep.subr.bf16.mxu0 0
      %1188 = vmatpush1.bf16.msra.mxu0 0
      %1189 = vmatprep.mubr.bf16.mxu0 0
      %1190 = vmatmul.mubr.bf16.gmra.mrb[0].mxu0 %v1152
      %v1191 = vpop.f32.mrb[0].mxu0
      %v1192 = vadd.f32 0.0, %v1191
      %v1193 = vpop.f32.mrb[0].mxu0
      %v1194 = vpop.f32.mrb[0].mxu0
      %v1195 = vpop.f32.mrb[0].mxu0
      %1196 = vdwg.mxu0
      %1198 = vrot.lane.b32.xlu0 %v1192, 24
      %v1199 = vpop.permute.xlu0 %1198
      %vm1201 = vcmask 261312
      %1202 = vst.msk [vmem:[%s189] sm:$0xff] %vm1201, %v1199
      %p1203 = scmp.lt.s32.totalorder %s17, 1
      %s1204 = scalar_select %p1203, %s17, 1
      %p1205 = scmp.lt.s32.totalorder %s18, 0
      %s1206 = scalar_select %p1205, %s18, 0
      %s1207 = sadd.s32 %s1206, %s1204
      %s1208 = smul.addr %s1207, 8
      %s1209 = scalar_lea.vmem %s2, %s1208
      // Predicated region
      $region29: #{_lambda_.17} parent=27 // pred_check
        %p1210 = pneg %p99
      $region30: #{_lambda_.17} parent=27 // pred_check_branch
        %1212 = sbr.rel (%p1210) target = $region32
      $region31: #{_lambda_.17} parent=27 // pred_region
        _
      $region32: #{_lambda_.17} parent=27 // pred_fallthru
        _
    $region28: #{_lambda_.17} parent=5 // pred_fallthru
      _
    %p1213 = scmp.le.s32.totalorder 2, %s8
    // Predicated region
    $region33: #{_lambda_.17} parent=5 // pred_check
      %p1214 = pneg %p1213
    $region34: #{_lambda_.17} parent=5 // pred_check_branch
      %1216 = sbr.rel (%p1214) target = $region36
    $region35: #{_lambda_.17} parent=5 // pred_region
      %s1217 = ssub.s32 %s8, 2
      // Predicated region
      $region37: #{_lambda_.17} parent=35 // pred_check
        %p1218 = pneg %p105
      $region38: #{_lambda_.17} parent=35 // pred_check_branch
        %1220 = sbr.rel (%p1218) target = $region40
      $region39: #{_lambda_.17} parent=35 // pred_region
        %p1221 = scmp.lt.s32.totalorder %s19, 1
        %s1222 = scalar_select %p1221, %s19, 1
        %p1223 = scmp.lt.s32.totalorder %s20, 0
        %s1224 = scalar_select %p1223, %s20, 0
        %s1225 = sadd.s32 %s1224, %s1222
        %s1226 = smul.addr %s1225, 8
        %s1227 = scalar_lea.vmem %s2, %s1226
      $region40: #{_lambda_.17} parent=35 // pred_fallthru
        _
    $region36: #{_lambda_.17} parent=5 // pred_fallthru
      _
  $region6: #{_lambda_.17} parent=0 // loop_footer
    %s12 = sadd.s32 1, %s8
  $region7: #{_lambda_.17} parent=0 // loop_footer_branch
    %7 = sbr.rel target = $region3
  $region8: #{_lambda_.17} parent=0 // loop_exit
    _

// kernel: _lambda_.29
$region0: #{_lambda_.29}
  #allocation0 [shape = 'u32[]', space=smem, size = 0x4, offset = 0x4, fixed_abs, tag = 'smem constant byte address 0x4 - core index']
  #allocation1 [shape = 'u32[144,128]{1,0:T(1,128)}', space=vmem, size = 0x12000, scoped, tag = 'internal scratch']
  %s0 = inlined_call_operand.vmem [shape: f32[16,32], index: 0, kind: input, shape index: {}]
  %s1 = inlined_call_operand.vmem [shape: f32[1,32], index: 1, kind: input, shape index: {}]
  %s2 = inlined_call_operand.vmem [shape: f32[1,32], index: 2, kind: input, shape index: {}]
  %s3 = inlined_call_operand.hbm [shape: f32[16,32], index: 3, kind: output, shape index: {}]
  %s4 = sld [smem:[#allocation0]]
  $region22: #{_lambda_.29} parent=0
    _
  %s6 = ssub.s32 1, %s4
  %s7 = scalar_select 0, %s6, %s4
  $region1: #{_lambda_.29} parent=0
    #allocation2 [shape = 'u8[8192]{0}', space=vmem, size = 0x2000, scoped, tag = 'output window, operand 0, single buffered']
    #allocation3 [shape = 's32[1]{0}', space=sflag, size = 0x4, scoped, tag = 'scoped memory for _lambda_.29']
    %8 = vsyncpa [#allocation3], 0
    // Predicated region
    $region2: #{_lambda_.29} parent=1 // pred_check
      _
    $region3: #{_lambda_.29} parent=1 // pred_check_branch
      %10 = sbr.rel (0) target = $region5
    $region4: #{_lambda_.29} parent=1 // pred_region
      _
    $region5: #{_lambda_.29} parent=1 // pred_fallthru
      _
    // Predicated region
    $region6: #{_lambda_.29} parent=1 // pred_check
      _
    $region7: #{_lambda_.29} parent=1 // pred_check_branch
      %12 = sbr.rel (0) target = $region9
    $region8: #{_lambda_.29} parent=1 // pred_region
      _
    $region9: #{_lambda_.29} parent=1 // pred_fallthru
      _
    // Predicated region
    $region10: #{_lambda_.29} parent=1 // pred_check
      _
    $region11: #{_lambda_.29} parent=1 // pred_check_branch
      %14 = sbr.rel (0) target = $region13
    $region12: #{_lambda_.29} parent=1 // pred_region
      _
    $region13: #{_lambda_.29} parent=1 // pred_fallthru
      _
    %v15 = vld [vmem:[%s0] sm:$0xff]
    %v16 = vld [vmem:[%s0 + $0x8] sm:$0xff]
    %vm17 = vcmask 261120
    %v18 = vsel %vm17, %v15, 0.0
    %19 = vadd.xlane.f32.xlu0 %v18
    %v20 = vpop.xlane.xlu0 %19
    %v21 = vsel %vm17, %v16, 0.0
    %22 = vadd.xlane.f32.xlu0 %v21
    %v23 = vpop.xlane.xlu0 %22
    %v24 = vrcp.pop 32.0
    %v25 = vmul.f32 %v20, %v24
    %v26 = vmul.f32 %v23, %v24
    %v27 = vsub.f32 %v15, %v25
    %v28 = vsub.f32 %v16, %v26
    %v29 = vmul.f32 %v27, %v27
    %v30 = vmul.f32 %v28, %v28
    %v31 = vsel %vm17, %v29, 0.0
    %32 = vadd.xlane.f32.xlu0 %v31
    %v33 = vpop.xlane.xlu0 %32
    %v34 = vsel %vm17, %v30, 0.0
    %35 = vadd.xlane.f32.xlu0 %v34
    %v36 = vpop.xlane.xlu0 %35
    %v37 = vrcp.pop 31.0
    %v38 = vmul.f32 %v33, %v37
    %v39 = vmul.f32 %v36, %v37
    %v40 = vrsqrt.pop %v38
    %v41 = vmul.f32 %v38, %v40
    %vm42 = vcmp.eq.f32.partialorder %v38, inf
    %v43 = vsel %vm42, %v38, %v41
    %vm44 = vcmp.eq.f32.partialorder %v38, 0.0
    %v45 = vand.u32 %v38, 2147483648
    %v46 = vsel %vm44, %v45, %v43
    %v47 = vrsqrt.pop %v39
    %v48 = vmul.f32 %v39, %v47
    %vm49 = vcmp.eq.f32.partialorder %v39, inf
    %v50 = vsel %vm49, %v39, %v48
    %vm51 = vcmp.eq.f32.partialorder %v39, 0.0
    %v52 = vand.u32 %v39, 2147483648
    %v53 = vsel %vm51, %v52, %v50
    %v54 = vadd.f32 %v46, 1e-06
    %v55 = vadd.f32 %v53, 1e-06
    %v56 = vrcp.pop %v54
    %v57 = vrcp.pop %v55
    %v58 = vld [vmem:[%s1] sm:$0x1]
    %v60 = vlaneseq
    %v61 = vshrl.u32 %v60, 7
    %v62 = vsub.s32 0, %v61
    %v63 = vrot.slane %v58, %v62
    %v65 = vmul.f32 %v63, %v27
    %v66 = vmul.f32 %v63, %v28
    %v67 = vmul.f32 %v65, %v56
    %v68 = vmul.f32 %v66, %v57
    %v69 = vld [vmem:[%s2] sm:$0x1]
    %v71 = vlaneseq
    %v72 = vshrl.u32 %v71, 7
    %v73 = vsub.s32 0, %v72
    %v74 = vrot.slane %v69, %v73
    %v76 = vadd.f32 %v67, %v74
    %v77 = vadd.f32 %v68, %v74
    %78 = vst.msk [vmem:[#allocation2] sm:$0xff] %vm17, %v76
    %79 = vst.msk [vmem:[#allocation2 + $0x8] sm:$0xff] %vm17, %v77
    // Predicated region
    $region14: #{_lambda_.29} parent=1 // pred_check
      _
    $region15: #{_lambda_.29} parent=1 // pred_check_branch
      %81 = sbr.rel (0) target = $region17
    $region16: #{_lambda_.29} parent=1 // pred_region
      %s83 = ssub.s32 256, 256
      %84 = vsyncadd [#allocation3], %s83
      %s85 = sshll.u32 [#allocation2], 4
      %s86 = int_to_ptr.vmem [resolvable:$true] %s85
      %91 = dma.vmem_to_hbm [thread:$0]  %s86, 256, %s3, [#allocation3], 128, 128, 8
    $region17: #{_lambda_.29} parent=1 // pred_fallthru
      _
    // Predicated region
    $region18: #{_lambda_.29} parent=1 // pred_check
      _
    $region19: #{_lambda_.29} parent=1 // pred_check_branch
      %93 = sbr.rel (0) target = $region21
    $region20: #{_lambda_.29} parent=1 // pred_region
      %94 = dma.done [#allocation3], 256
    $region21: #{_lambda_.29} parent=1 // pred_fallthru
      _
    %95 = vsyncpa [#allocation3], 1

</llo_original>
